<compile_context>
chip_gen: v7x
topology: tpu7x:2x2x1
jax: 0.10.0
libtpu: 0.0.40
codegen_flags: <defaults>
</compile_context>

<pallas_src>
import functools

import jax
import jax.numpy as jnp
from jax import lax
from jax.experimental import pallas as pl
from jax.experimental.pallas import tpu as pltpu


def _ammoe_fused_kernel(x_ref, w_proj_ref, b_proj_ref, w_hh_ref, w_tow_ref,
                        out0_ref, out1_ref, *, per_task_batch, hidden, out_size):
    """Both tasks fused along the (padded) batch dim, time-major.

    x_ref      : (T, NBP, D)     stacked task inputs, NBP = pad(2*B, 8)
    w_proj_ref : (D, 4H+2)       [W_ih^T | gate0_w^T | gate1_w^T]
    b_proj_ref : (1, 4H+2)       [b_ih + b_hh | gate0_b | gate1_b]
    w_hh_ref   : (H, 4H)         shared LSTM recurrent weights, pre-transposed
    w_tow_ref  : (H+1, 2*O)      both tower weights, last row = both biases
    out0_ref   : (B, 1, O)       task-0 output
    out1_ref   : (B, 1, O)       task-1 output
    """
    T, NBP, D = x_ref.shape
    H = hidden
    O = out_size
    B = per_task_batch

    x = x_ref[...]                                              # (T, NBP, D)

    # ---- one fused projection: LSTM pre-activations + both gate logits ----
    # NBP is a multiple of 8, so the leading-dim collapse is tile-aligned.
    xw = jnp.dot(x.reshape(T * NBP, D), w_proj_ref[...],
                 preferred_element_type=jnp.float32) + b_proj_ref[...]
    xw = xw.reshape(T, NBP, 4 * H + 2)

    xw_lstm = xw[:, :, 0:4 * H]                                 # (T, NBP, 4H)

    # ---- gate: rows [0,B) use gate0's logit column, rows [B,2B) gate1's ----
    row = lax.broadcasted_iota(jnp.int32, (T, NBP, 1), 1)
    logits = jnp.where(row < B,
                       xw[:, :, 4 * H:4 * H + 1],
                       xw[:, :, 4 * H + 1:4 * H + 2])           # (T, NBP, 1)

    # softmax over time == elementwise ops + reduce across the leading (T) axis
    m = jnp.max(logits, axis=0, keepdims=True)
    e = jnp.exp(logits - m)
    gate_w = e / jnp.sum(e, axis=0, keepdims=True)              # (T, NBP, 1)

    # hoist the per-step lane broadcast out of the recurrence
    gate3 = gate_w * jnp.ones((1, 1, H), jnp.float32)           # (T, NBP, H)

    w_hh = w_hh_ref[...]                                        # (H, 4H)

    h = jnp.zeros((NBP, H), jnp.float32)
    c = jnp.zeros((NBP, H), jnp.float32)
    comb = jnp.zeros((NBP, H), jnp.float32)

    # ---- statically unrolled LSTM recurrence (T is small & static) --------
    for t in range(T):
        z = xw_lstm[t] + jnp.dot(h, w_hh,
                                 preferred_element_type=jnp.float32)  # (NBP, 4H)
        zs = jax.nn.sigmoid(z)                                  # one EUP pass, 4H lanes
        i_g = zs[:, 0 * H:1 * H]
        f_g = zs[:, 1 * H:2 * H]
        o_g = zs[:, 3 * H:4 * H]
        g_g = jnp.tanh(z[:, 2 * H:3 * H])                       # tanh only on g slice
        c = f_g * c + i_g * g_g
        h = o_g * jnp.tanh(c)
        comb = comb + gate3[t] * h                              # weighted combine

    # ---- towers: one (NBP, H) @ (H, 2*O) matmul, direct per-task stores ---
    w_tow = w_tow_ref[0:H, :]                                   # (H, 2O)
    b_tow = w_tow_ref[H:H + 1, :]                               # (1, 2O)
    out_all = jnp.dot(comb, w_tow,
                      preferred_element_type=jnp.float32) + b_tow   # (NBP, 2O)

    out0_ref[...] = out_all[0:B, 0:O].reshape(B, 1, O)
    out1_ref[...] = out_all[B:2 * B, O:2 * O].reshape(B, 1, O)


def prepare_ammoe_params(params):
    """One-time host-side packing of the module parameters (cacheable)."""
    D = params["w_ih"].shape[1]
    H = params["w_hh"].shape[1]
    O = params["tower_w"][0].shape[0]

    w_proj = jnp.concatenate(
        [params["w_ih"].T.astype(jnp.float32),                  # (D, 4H)
         params["gate_w"][0].T.astype(jnp.float32),             # (D, 1)
         params["gate_w"][1].T.astype(jnp.float32)], axis=1)    # (D, 4H+2)
    b_proj = jnp.concatenate(
        [(params["b_ih"] + params["b_hh"]).reshape(1, 4 * H).astype(jnp.float32),
         params["gate_b"][0].reshape(1, 1).astype(jnp.float32),
         params["gate_b"][1].reshape(1, 1).astype(jnp.float32)], axis=1)  # (1, 4H+2)
    w_hh_t = params["w_hh"].T.astype(jnp.float32)               # (H, 4H)
    w_tow_full = jnp.concatenate(
        [jnp.concatenate([params["tower_w"][0].T, params["tower_w"][1].T],
                         axis=1).astype(jnp.float32),           # (H, 2O)
         jnp.concatenate([params["tower_b"][0].reshape(1, O),
                          params["tower_b"][1].reshape(1, O)],
                         axis=1).astype(jnp.float32)], axis=0)  # (H+1, 2O)
    return {"w_proj": w_proj, "b_proj": b_proj,
            "w_hh_t": w_hh_t, "w_tow_full": w_tow_full}


@jax.jit
def _forward_impl(x0, x1, w_proj, b_proj, w_hh_t, w_tow_full):
    B, T, D = x0.shape
    H = w_hh_t.shape[0]
    O = w_tow_full.shape[1] // 2
    NB = 2 * B
    NBP = max(8, ((NB + 7) // 8) * 8)        # keep batch rows a multiple of 8

    # stack both tasks along batch, go time-major, pad sublanes with zeros
    x = jnp.concatenate([x0.astype(jnp.float32), x1.astype(jnp.float32)], axis=0)
    x = jnp.transpose(x, (1, 0, 2))                              # (T, NB, D)
    if NBP != NB:
        x = jnp.pad(x, ((0, 0), (0, NBP - NB), (0, 0)))          # (T, NBP, D)

    kernel = functools.partial(_ammoe_fused_kernel,
                               per_task_batch=B, hidden=H, out_size=O)
    vmem = pl.BlockSpec(memory_space=pltpu.MemorySpace.VMEM)
    # NOTE: no grid — at these shapes the whole problem is a handful of vregs.
    # For large NB on v7x, add grid=(cdiv(NB, TNB),) with
    # dimension_semantics=("parallel",) to use both TensorCores.
    out0, out1 = pl.pallas_call(
        kernel,
        out_shape=(jax.ShapeDtypeStruct((B, 1, O), jnp.float32),
                   jax.ShapeDtypeStruct((B, 1, O), jnp.float32)),
        in_specs=[vmem] * 5,
        out_specs=(vmem, vmem),
    )(x, w_proj, b_proj, w_hh_t, w_tow_full)
    return out0, out1


def ammoe_forward(inputs_, prepped):
    """Mirrors aMMOE.forward: returns a list of per-task outputs (B, 1, out_size)."""
    assert len(inputs_) == 2, "aMMOE has exactly two gates/towers"
    out0, out1 = _forward_impl(inputs_[0], inputs_[1],
                               prepped["w_proj"], prepped["b_proj"],
                               prepped["w_hh_t"], prepped["w_tow_full"])
    return [out0, out1]


# ---------------- pure-JAX reference (mirrors PyTorch semantics) --------------
def _ref_forward(inputs_, params):
    w_ih, w_hh = params["w_ih"], params["w_hh"]                 # (4H, D), (4H, H)
    b = params["b_ih"] + params["b_hh"]
    H = w_hh.shape[1]
    outs = []
    for j, x in enumerate(inputs_):
        B, T, D = x.shape

        def cell(carry, x_t):
            h, c = carry
            z = x_t @ w_ih.T + h @ w_hh.T + b
            i = jax.nn.sigmoid(z[:, :H])
            f = jax.nn.sigmoid(z[:, H:2 * H])
            g = jnp.tanh(z[:, 2 * H:3 * H])
            o = jax.nn.sigmoid(z[:, 3 * H:])
            c = f * c + i * g
            h = o * jnp.tanh(c)
            return (h, c), h

        (h, c), hs = lax.scan(cell, (jnp.zeros((B, H)), jnp.zeros((B, H))),
                              jnp.swapaxes(x, 0, 1))
        expert = jnp.swapaxes(hs, 0, 1)                         # (B, T, H)
        logits = x @ params["gate_w"][j].T + params["gate_b"][j]    # (B, T, 1)
        gate = jax.nn.softmax(logits, axis=1)
        combined = jnp.matmul(jnp.swapaxes(gate, 1, 2), expert)     # (B, 1, H)
        tower = combined[:, -1:] @ params["tower_w"][j].T + params["tower_b"][j]
        outs.append(tower)                                      # (B, 1, O)
    return outs


if __name__ == "__main__":
    B, T, D, H, O = 2, 8, 32, 32, 4   # batch, seq, input_size, hidden_size, out_size
    key = jax.random.PRNGKey(0)
    ks = jax.random.split(key, 12)
    s = 1.0 / jnp.sqrt(H)

    params = {
        "w_ih": jax.random.uniform(ks[0], (4 * H, D), jnp.float32, -s, s),
        "w_hh": jax.random.uniform(ks[1], (4 * H, H), jnp.float32, -s, s),
        "b_ih": jax.random.uniform(ks[2], (4 * H,), jnp.float32, -s, s),
        "b_hh": jax.random.uniform(ks[3], (4 * H,), jnp.float32, -s, s),
        "gate_w": [jax.random.uniform(ks[4], (1, D), jnp.float32, -s, s),
                   jax.random.uniform(ks[5], (1, D), jnp.float32, -s, s)],
        "gate_b": [jax.random.uniform(ks[6], (1,), jnp.float32, -s, s),
                   jax.random.uniform(ks[7], (1,), jnp.float32, -s, s)],
        "tower_w": [jax.random.uniform(ks[8], (O, H), jnp.float32, -s, s),
                    jax.random.uniform(ks[9], (O, H), jnp.float32, -s, s)],
        "tower_b": [jax.random.uniform(ks[10], (O,), jnp.float32, -s, s),
                    jax.random.uniform(ks[11], (O,), jnp.float32, -s, s)],
    }

    ik = jax.random.split(jax.random.PRNGKey(1), 2)
    inputs_ = [jax.random.normal(ik[0], (B, T, D), jnp.float32),
               jax.random.normal(ik[1], (B, T, D), jnp.float32)]

    # one-time parameter packing (hoisted out of the per-call path)
    prepped = prepare_ammoe_params(params)
    prepped = jax.tree_util.tree_map(jax.block_until_ready, prepped)

    outs = ammoe_forward(inputs_, prepped)
    outs = [jax.block_until_ready(o) for o in outs]

    refs = _ref_forward(inputs_, params)
    for o, r in zip(outs, refs):
        assert o.shape == (B, 1, O), o.shape
        assert jnp.allclose(o, r, atol=1e-4, rtol=1e-4), (o, r)

    print("KERNEL_OK")
</pallas_src>

<mosaic_0001>
module attributes {stable_mosaic.version = 11 : i64} {
  func.func @_ammoe_fused_kernel(%arg0: memref<8x8x32xf32, #tpu.memory_space<vmem>>, %arg1: memref<32x130xf32, #tpu.memory_space<vmem>>, %arg2: memref<1x130xf32, #tpu.memory_space<vmem>>, %arg3: memref<32x128xf32, #tpu.memory_space<vmem>>, %arg4: memref<33x8xf32, #tpu.memory_space<vmem>>, %arg5: memref<2x1x4xf32, #tpu.memory_space<vmem>>, %arg6: memref<2x1x4xf32, #tpu.memory_space<vmem>>) attributes {dimension_semantics = [], scalar_prefetch = 0 : i64, scratch_operands = 0 : i64, tpu.core_type = #tpu.core_type<tc>} {
    %c0 = arith.constant 0 : index
    %c0_0 = arith.constant 0 : index
    %c0_1 = arith.constant 0 : index
    %0 = vector.load %arg0[%c0, %c0_0, %c0_1] : memref<8x8x32xf32, #tpu.memory_space<vmem>>, vector<8x8x32xf32>
    %1 = vector.shape_cast %0 : vector<8x8x32xf32> to vector<64x32xf32>
    %c0_2 = arith.constant 0 : index
    %c0_3 = arith.constant 0 : index
    %2 = vector.load %arg1[%c0_2, %c0_3] : memref<32x130xf32, #tpu.memory_space<vmem>>, vector<32x130xf32>
    %cst = arith.constant dense<0.000000e+00> : vector<64x130xf32>
    %3 = tpu.matmul %1, %2, %cst {dimension_numbers = #tpu.dot_dimension_numbers<[1], [0], [0], [1], [0, 0, 1, 1], [], []>} : vector<64x32xf32>, vector<32x130xf32>, vector<64x130xf32> -> vector<64x130xf32>
    %c0_4 = arith.constant 0 : index
    %c0_5 = arith.constant 0 : index
    %4 = vector.load %arg2[%c0_4, %c0_5] : memref<1x130xf32, #tpu.memory_space<vmem>>, vector<1x130xf32>
    %5 = vector.broadcast %4 : vector<1x130xf32> to vector<64x130xf32>
    %6 = arith.addf %3, %5 : vector<64x130xf32>
    %7 = vector.shape_cast %6 : vector<64x130xf32> to vector<8x8x130xf32>
    %8 = vector.extract_strided_slice %7 {offsets = [0, 0, 0], sizes = [8, 8, 128], strides = [1, 1, 1]} : vector<8x8x130xf32> to vector<8x8x128xf32>
    %9 = tpu.iota {dimensions = array<i32: 1>} : vector<8x8x1xi32>
    %c2_i32 = arith.constant 2 : i32
    %10 = vector.broadcast %c2_i32 : i32 to vector<8x8x1xi32>
    %11 = arith.cmpi slt, %9, %10 : vector<8x8x1xi32>
    %12 = vector.extract_strided_slice %7 {offsets = [0, 0, 128], sizes = [8, 8, 1], strides = [1, 1, 1]} : vector<8x8x130xf32> to vector<8x8x1xf32>
    %13 = vector.extract_strided_slice %7 {offsets = [0, 0, 129], sizes = [8, 8, 1], strides = [1, 1, 1]} : vector<8x8x130xf32> to vector<8x8x1xf32>
    %14 = arith.select %11, %12, %13 : vector<8x8x1xi1>, vector<8x8x1xf32>
    %cst_6 = arith.constant dense<0xFF800000> : vector<8x1xf32>
    %15 = vector.multi_reduction <maximumf>, %14, %cst_6 [0] : vector<8x8x1xf32> to vector<8x1xf32>
    %16 = vector.shape_cast %15 : vector<8x1xf32> to vector<1x8x1xf32>
    %17 = vector.broadcast %16 : vector<1x8x1xf32> to vector<8x8x1xf32>
    %18 = arith.subf %14, %17 : vector<8x8x1xf32>
    %19 = math.exp %18 : vector<8x8x1xf32>
    %cst_7 = arith.constant dense<0.000000e+00> : vector<8x1xf32>
    %20 = vector.multi_reduction <add>, %19, %cst_7 [0] : vector<8x8x1xf32> to vector<8x1xf32>
    %21 = vector.shape_cast %20 : vector<8x1xf32> to vector<1x8x1xf32>
    %22 = vector.broadcast %21 : vector<1x8x1xf32> to vector<8x8x1xf32>
    %23 = arith.divf %19, %22 : vector<8x8x1xf32>
    %cst_8 = arith.constant 1.000000e+00 : f32
    %24 = vector.broadcast %cst_8 : f32 to vector<1x1x32xf32>
    %25 = vector.broadcast %23 : vector<8x8x1xf32> to vector<8x8x32xf32>
    %26 = vector.broadcast %24 : vector<1x1x32xf32> to vector<8x8x32xf32>
    %27 = arith.mulf %25, %26 : vector<8x8x32xf32>
    %c0_9 = arith.constant 0 : index
    %c0_10 = arith.constant 0 : index
    %28 = vector.load %arg3[%c0_9, %c0_10] : memref<32x128xf32, #tpu.memory_space<vmem>>, vector<32x128xf32>
    %cst_11 = arith.constant 0.000000e+00 : f32
    %29 = vector.broadcast %cst_11 : f32 to vector<8x32xf32>
    %cst_12 = arith.constant 0.000000e+00 : f32
    %30 = vector.broadcast %cst_12 : f32 to vector<8x32xf32>
    %cst_13 = arith.constant 0.000000e+00 : f32
    %31 = vector.broadcast %cst_13 : f32 to vector<8x32xf32>
    %32 = vector.extract_strided_slice %8 {offsets = [0, 0, 0], sizes = [1, 8, 128], strides = [1, 1, 1]} : vector<8x8x128xf32> to vector<1x8x128xf32>
    %33 = vector.shape_cast %32 : vector<1x8x128xf32> to vector<8x128xf32>
    %cst_14 = arith.constant dense<0.000000e+00> : vector<8x128xf32>
    %34 = tpu.matmul %29, %28, %cst_14 {dimension_numbers = #tpu.dot_dimension_numbers<[1], [0], [0], [1], [0, 0, 1, 1], [], []>} : vector<8x32xf32>, vector<32x128xf32>, vector<8x128xf32> -> vector<8x128xf32>
    %35 = arith.addf %33, %34 : vector<8x128xf32>
    %36 = arith.negf %35 : vector<8x128xf32>
    %37 = math.exp %36 : vector<8x128xf32>
    %cst_15 = arith.constant 1.000000e+00 : f32
    %38 = vector.broadcast %cst_15 : f32 to vector<8x128xf32>
    %39 = arith.addf %38, %37 : vector<8x128xf32>
    %40 = arith.divf %38, %39 : vector<8x128xf32>
    %41 = vector.extract_strided_slice %40 {offsets = [0, 0], sizes = [8, 32], strides = [1, 1]} : vector<8x128xf32> to vector<8x32xf32>
    %42 = vector.extract_strided_slice %40 {offsets = [0, 32], sizes = [8, 32], strides = [1, 1]} : vector<8x128xf32> to vector<8x32xf32>
    %43 = vector.extract_strided_slice %40 {offsets = [0, 96], sizes = [8, 32], strides = [1, 1]} : vector<8x128xf32> to vector<8x32xf32>
    %44 = vector.extract_strided_slice %35 {offsets = [0, 64], sizes = [8, 32], strides = [1, 1]} : vector<8x128xf32> to vector<8x32xf32>
    %45 = math.tanh %44 : vector<8x32xf32>
    %46 = arith.mulf %42, %30 : vector<8x32xf32>
    %47 = arith.mulf %41, %45 : vector<8x32xf32>
    %48 = arith.addf %46, %47 : vector<8x32xf32>
    %49 = math.tanh %48 : vector<8x32xf32>
    %50 = arith.mulf %43, %49 : vector<8x32xf32>
    %51 = vector.extract_strided_slice %27 {offsets = [0, 0, 0], sizes = [1, 8, 32], strides = [1, 1, 1]} : vector<8x8x32xf32> to vector<1x8x32xf32>
    %52 = vector.shape_cast %51 : vector<1x8x32xf32> to vector<8x32xf32>
    %53 = arith.mulf %52, %50 : vector<8x32xf32>
    %54 = arith.addf %31, %53 : vector<8x32xf32>
    %55 = vector.extract_strided_slice %8 {offsets = [1, 0, 0], sizes = [1, 8, 128], strides = [1, 1, 1]} : vector<8x8x128xf32> to vector<1x8x128xf32>
    %56 = vector.shape_cast %55 : vector<1x8x128xf32> to vector<8x128xf32>
    %cst_16 = arith.constant dense<0.000000e+00> : vector<8x128xf32>
    %57 = tpu.matmul %50, %28, %cst_16 {dimension_numbers = #tpu.dot_dimension_numbers<[1], [0], [0], [1], [0, 0, 1, 1], [], []>} : vector<8x32xf32>, vector<32x128xf32>, vector<8x128xf32> -> vector<8x128xf32>
    %58 = arith.addf %56, %57 : vector<8x128xf32>
    %59 = arith.negf %58 : vector<8x128xf32>
    %60 = math.exp %59 : vector<8x128xf32>
    %cst_17 = arith.constant 1.000000e+00 : f32
    %61 = vector.broadcast %cst_17 : f32 to vector<8x128xf32>
    %62 = arith.addf %61, %60 : vector<8x128xf32>
    %63 = arith.divf %61, %62 : vector<8x128xf32>
    %64 = vector.extract_strided_slice %63 {offsets = [0, 0], sizes = [8, 32], strides = [1, 1]} : vector<8x128xf32> to vector<8x32xf32>
    %65 = vector.extract_strided_slice %63 {offsets = [0, 32], sizes = [8, 32], strides = [1, 1]} : vector<8x128xf32> to vector<8x32xf32>
    %66 = vector.extract_strided_slice %63 {offsets = [0, 96], sizes = [8, 32], strides = [1, 1]} : vector<8x128xf32> to vector<8x32xf32>
    %67 = vector.extract_strided_slice %58 {offsets = [0, 64], sizes = [8, 32], strides = [1, 1]} : vector<8x128xf32> to vector<8x32xf32>
    %68 = math.tanh %67 : vector<8x32xf32>
    %69 = arith.mulf %65, %48 : vector<8x32xf32>
    %70 = arith.mulf %64, %68 : vector<8x32xf32>
    %71 = arith.addf %69, %70 : vector<8x32xf32>
    %72 = math.tanh %71 : vector<8x32xf32>
    %73 = arith.mulf %66, %72 : vector<8x32xf32>
    %74 = vector.extract_strided_slice %27 {offsets = [1, 0, 0], sizes = [1, 8, 32], strides = [1, 1, 1]} : vector<8x8x32xf32> to vector<1x8x32xf32>
    %75 = vector.shape_cast %74 : vector<1x8x32xf32> to vector<8x32xf32>
    %76 = arith.mulf %75, %73 : vector<8x32xf32>
    %77 = arith.addf %54, %76 : vector<8x32xf32>
    %78 = vector.extract_strided_slice %8 {offsets = [2, 0, 0], sizes = [1, 8, 128], strides = [1, 1, 1]} : vector<8x8x128xf32> to vector<1x8x128xf32>
    %79 = vector.shape_cast %78 : vector<1x8x128xf32> to vector<8x128xf32>
    %cst_18 = arith.constant dense<0.000000e+00> : vector<8x128xf32>
    %80 = tpu.matmul %73, %28, %cst_18 {dimension_numbers = #tpu.dot_dimension_numbers<[1], [0], [0], [1], [0, 0, 1, 1], [], []>} : vector<8x32xf32>, vector<32x128xf32>, vector<8x128xf32> -> vector<8x128xf32>
    %81 = arith.addf %79, %80 : vector<8x128xf32>
    %82 = arith.negf %81 : vector<8x128xf32>
    %83 = math.exp %82 : vector<8x128xf32>
    %cst_19 = arith.constant 1.000000e+00 : f32
    %84 = vector.broadcast %cst_19 : f32 to vector<8x128xf32>
    %85 = arith.addf %84, %83 : vector<8x128xf32>
    %86 = arith.divf %84, %85 : vector<8x128xf32>
    %87 = vector.extract_strided_slice %86 {offsets = [0, 0], sizes = [8, 32], strides = [1, 1]} : vector<8x128xf32> to vector<8x32xf32>
    %88 = vector.extract_strided_slice %86 {offsets = [0, 32], sizes = [8, 32], strides = [1, 1]} : vector<8x128xf32> to vector<8x32xf32>
    %89 = vector.extract_strided_slice %86 {offsets = [0, 96], sizes = [8, 32], strides = [1, 1]} : vector<8x128xf32> to vector<8x32xf32>
    %90 = vector.extract_strided_slice %81 {offsets = [0, 64], sizes = [8, 32], strides = [1, 1]} : vector<8x128xf32> to vector<8x32xf32>
    %91 = math.tanh %90 : vector<8x32xf32>
    %92 = arith.mulf %88, %71 : vector<8x32xf32>
    %93 = arith.mulf %87, %91 : vector<8x32xf32>
    %94 = arith.addf %92, %93 : vector<8x32xf32>
    %95 = math.tanh %94 : vector<8x32xf32>
    %96 = arith.mulf %89, %95 : vector<8x32xf32>
    %97 = vector.extract_strided_slice %27 {offsets = [2, 0, 0], sizes = [1, 8, 32], strides = [1, 1, 1]} : vector<8x8x32xf32> to vector<1x8x32xf32>
    %98 = vector.shape_cast %97 : vector<1x8x32xf32> to vector<8x32xf32>
    %99 = arith.mulf %98, %96 : vector<8x32xf32>
    %100 = arith.addf %77, %99 : vector<8x32xf32>
    %101 = vector.extract_strided_slice %8 {offsets = [3, 0, 0], sizes = [1, 8, 128], strides = [1, 1, 1]} : vector<8x8x128xf32> to vector<1x8x128xf32>
    %102 = vector.shape_cast %101 : vector<1x8x128xf32> to vector<8x128xf32>
    %cst_20 = arith.constant dense<0.000000e+00> : vector<8x128xf32>
    %103 = tpu.matmul %96, %28, %cst_20 {dimension_numbers = #tpu.dot_dimension_numbers<[1], [0], [0], [1], [0, 0, 1, 1], [], []>} : vector<8x32xf32>, vector<32x128xf32>, vector<8x128xf32> -> vector<8x128xf32>
    %104 = arith.addf %102, %103 : vector<8x128xf32>
    %105 = arith.negf %104 : vector<8x128xf32>
    %106 = math.exp %105 : vector<8x128xf32>
    %cst_21 = arith.constant 1.000000e+00 : f32
    %107 = vector.broadcast %cst_21 : f32 to vector<8x128xf32>
    %108 = arith.addf %107, %106 : vector<8x128xf32>
    %109 = arith.divf %107, %108 : vector<8x128xf32>
    %110 = vector.extract_strided_slice %109 {offsets = [0, 0], sizes = [8, 32], strides = [1, 1]} : vector<8x128xf32> to vector<8x32xf32>
    %111 = vector.extract_strided_slice %109 {offsets = [0, 32], sizes = [8, 32], strides = [1, 1]} : vector<8x128xf32> to vector<8x32xf32>
    %112 = vector.extract_strided_slice %109 {offsets = [0, 96], sizes = [8, 32], strides = [1, 1]} : vector<8x128xf32> to vector<8x32xf32>
    %113 = vector.extract_strided_slice %104 {offsets = [0, 64], sizes = [8, 32], strides = [1, 1]} : vector<8x128xf32> to vector<8x32xf32>
    %114 = math.tanh %113 : vector<8x32xf32>
    %115 = arith.mulf %111, %94 : vector<8x32xf32>
    %116 = arith.mulf %110, %114 : vector<8x32xf32>
    %117 = arith.addf %115, %116 : vector<8x32xf32>
    %118 = math.tanh %117 : vector<8x32xf32>
    %119 = arith.mulf %112, %118 : vector<8x32xf32>
    %120 = vector.extract_strided_slice %27 {offsets = [3, 0, 0], sizes = [1, 8, 32], strides = [1, 1, 1]} : vector<8x8x32xf32> to vector<1x8x32xf32>
    %121 = vector.shape_cast %120 : vector<1x8x32xf32> to vector<8x32xf32>
    %122 = arith.mulf %121, %119 : vector<8x32xf32>
    %123 = arith.addf %100, %122 : vector<8x32xf32>
    %124 = vector.extract_strided_slice %8 {offsets = [4, 0, 0], sizes = [1, 8, 128], strides = [1, 1, 1]} : vector<8x8x128xf32> to vector<1x8x128xf32>
    %125 = vector.shape_cast %124 : vector<1x8x128xf32> to vector<8x128xf32>
    %cst_22 = arith.constant dense<0.000000e+00> : vector<8x128xf32>
    %126 = tpu.matmul %119, %28, %cst_22 {dimension_numbers = #tpu.dot_dimension_numbers<[1], [0], [0], [1], [0, 0, 1, 1], [], []>} : vector<8x32xf32>, vector<32x128xf32>, vector<8x128xf32> -> vector<8x128xf32>
    %127 = arith.addf %125, %126 : vector<8x128xf32>
    %128 = arith.negf %127 : vector<8x128xf32>
    %129 = math.exp %128 : vector<8x128xf32>
    %cst_23 = arith.constant 1.000000e+00 : f32
    %130 = vector.broadcast %cst_23 : f32 to vector<8x128xf32>
    %131 = arith.addf %130, %129 : vector<8x128xf32>
    %132 = arith.divf %130, %131 : vector<8x128xf32>
    %133 = vector.extract_strided_slice %132 {offsets = [0, 0], sizes = [8, 32], strides = [1, 1]} : vector<8x128xf32> to vector<8x32xf32>
    %134 = vector.extract_strided_slice %132 {offsets = [0, 32], sizes = [8, 32], strides = [1, 1]} : vector<8x128xf32> to vector<8x32xf32>
    %135 = vector.extract_strided_slice %132 {offsets = [0, 96], sizes = [8, 32], strides = [1, 1]} : vector<8x128xf32> to vector<8x32xf32>
    %136 = vector.extract_strided_slice %127 {offsets = [0, 64], sizes = [8, 32], strides = [1, 1]} : vector<8x128xf32> to vector<8x32xf32>
    %137 = math.tanh %136 : vector<8x32xf32>
    %138 = arith.mulf %134, %117 : vector<8x32xf32>
    %139 = arith.mulf %133, %137 : vector<8x32xf32>
    %140 = arith.addf %138, %139 : vector<8x32xf32>
    %141 = math.tanh %140 : vector<8x32xf32>
    %142 = arith.mulf %135, %141 : vector<8x32xf32>
    %143 = vector.extract_strided_slice %27 {offsets = [4, 0, 0], sizes = [1, 8, 32], strides = [1, 1, 1]} : vector<8x8x32xf32> to vector<1x8x32xf32>
    %144 = vector.shape_cast %143 : vector<1x8x32xf32> to vector<8x32xf32>
    %145 = arith.mulf %144, %142 : vector<8x32xf32>
    %146 = arith.addf %123, %145 : vector<8x32xf32>
    %147 = vector.extract_strided_slice %8 {offsets = [5, 0, 0], sizes = [1, 8, 128], strides = [1, 1, 1]} : vector<8x8x128xf32> to vector<1x8x128xf32>
    %148 = vector.shape_cast %147 : vector<1x8x128xf32> to vector<8x128xf32>
    %cst_24 = arith.constant dense<0.000000e+00> : vector<8x128xf32>
    %149 = tpu.matmul %142, %28, %cst_24 {dimension_numbers = #tpu.dot_dimension_numbers<[1], [0], [0], [1], [0, 0, 1, 1], [], []>} : vector<8x32xf32>, vector<32x128xf32>, vector<8x128xf32> -> vector<8x128xf32>
    %150 = arith.addf %148, %149 : vector<8x128xf32>
    %151 = arith.negf %150 : vector<8x128xf32>
    %152 = math.exp %151 : vector<8x128xf32>
    %cst_25 = arith.constant 1.000000e+00 : f32
    %153 = vector.broadcast %cst_25 : f32 to vector<8x128xf32>
    %154 = arith.addf %153, %152 : vector<8x128xf32>
    %155 = arith.divf %153, %154 : vector<8x128xf32>
    %156 = vector.extract_strided_slice %155 {offsets = [0, 0], sizes = [8, 32], strides = [1, 1]} : vector<8x128xf32> to vector<8x32xf32>
    %157 = vector.extract_strided_slice %155 {offsets = [0, 32], sizes = [8, 32], strides = [1, 1]} : vector<8x128xf32> to vector<8x32xf32>
    %158 = vector.extract_strided_slice %155 {offsets = [0, 96], sizes = [8, 32], strides = [1, 1]} : vector<8x128xf32> to vector<8x32xf32>
    %159 = vector.extract_strided_slice %150 {offsets = [0, 64], sizes = [8, 32], strides = [1, 1]} : vector<8x128xf32> to vector<8x32xf32>
    %160 = math.tanh %159 : vector<8x32xf32>
    %161 = arith.mulf %157, %140 : vector<8x32xf32>
    %162 = arith.mulf %156, %160 : vector<8x32xf32>
    %163 = arith.addf %161, %162 : vector<8x32xf32>
    %164 = math.tanh %163 : vector<8x32xf32>
    %165 = arith.mulf %158, %164 : vector<8x32xf32>
    %166 = vector.extract_strided_slice %27 {offsets = [5, 0, 0], sizes = [1, 8, 32], strides = [1, 1, 1]} : vector<8x8x32xf32> to vector<1x8x32xf32>
    %167 = vector.shape_cast %166 : vector<1x8x32xf32> to vector<8x32xf32>
    %168 = arith.mulf %167, %165 : vector<8x32xf32>
    %169 = arith.addf %146, %168 : vector<8x32xf32>
    %170 = vector.extract_strided_slice %8 {offsets = [6, 0, 0], sizes = [1, 8, 128], strides = [1, 1, 1]} : vector<8x8x128xf32> to vector<1x8x128xf32>
    %171 = vector.shape_cast %170 : vector<1x8x128xf32> to vector<8x128xf32>
    %cst_26 = arith.constant dense<0.000000e+00> : vector<8x128xf32>
    %172 = tpu.matmul %165, %28, %cst_26 {dimension_numbers = #tpu.dot_dimension_numbers<[1], [0], [0], [1], [0, 0, 1, 1], [], []>} : vector<8x32xf32>, vector<32x128xf32>, vector<8x128xf32> -> vector<8x128xf32>
    %173 = arith.addf %171, %172 : vector<8x128xf32>
    %174 = arith.negf %173 : vector<8x128xf32>
    %175 = math.exp %174 : vector<8x128xf32>
    %cst_27 = arith.constant 1.000000e+00 : f32
    %176 = vector.broadcast %cst_27 : f32 to vector<8x128xf32>
    %177 = arith.addf %176, %175 : vector<8x128xf32>
    %178 = arith.divf %176, %177 : vector<8x128xf32>
    %179 = vector.extract_strided_slice %178 {offsets = [0, 0], sizes = [8, 32], strides = [1, 1]} : vector<8x128xf32> to vector<8x32xf32>
    %180 = vector.extract_strided_slice %178 {offsets = [0, 32], sizes = [8, 32], strides = [1, 1]} : vector<8x128xf32> to vector<8x32xf32>
    %181 = vector.extract_strided_slice %178 {offsets = [0, 96], sizes = [8, 32], strides = [1, 1]} : vector<8x128xf32> to vector<8x32xf32>
    %182 = vector.extract_strided_slice %173 {offsets = [0, 64], sizes = [8, 32], strides = [1, 1]} : vector<8x128xf32> to vector<8x32xf32>
    %183 = math.tanh %182 : vector<8x32xf32>
    %184 = arith.mulf %180, %163 : vector<8x32xf32>
    %185 = arith.mulf %179, %183 : vector<8x32xf32>
    %186 = arith.addf %184, %185 : vector<8x32xf32>
    %187 = math.tanh %186 : vector<8x32xf32>
    %188 = arith.mulf %181, %187 : vector<8x32xf32>
    %189 = vector.extract_strided_slice %27 {offsets = [6, 0, 0], sizes = [1, 8, 32], strides = [1, 1, 1]} : vector<8x8x32xf32> to vector<1x8x32xf32>
    %190 = vector.shape_cast %189 : vector<1x8x32xf32> to vector<8x32xf32>
    %191 = arith.mulf %190, %188 : vector<8x32xf32>
    %192 = arith.addf %169, %191 : vector<8x32xf32>
    %193 = vector.extract_strided_slice %8 {offsets = [7, 0, 0], sizes = [1, 8, 128], strides = [1, 1, 1]} : vector<8x8x128xf32> to vector<1x8x128xf32>
    %194 = vector.shape_cast %193 : vector<1x8x128xf32> to vector<8x128xf32>
    %cst_28 = arith.constant dense<0.000000e+00> : vector<8x128xf32>
    %195 = tpu.matmul %188, %28, %cst_28 {dimension_numbers = #tpu.dot_dimension_numbers<[1], [0], [0], [1], [0, 0, 1, 1], [], []>} : vector<8x32xf32>, vector<32x128xf32>, vector<8x128xf32> -> vector<8x128xf32>
    %196 = arith.addf %194, %195 : vector<8x128xf32>
    %197 = arith.negf %196 : vector<8x128xf32>
    %198 = math.exp %197 : vector<8x128xf32>
    %cst_29 = arith.constant 1.000000e+00 : f32
    %199 = vector.broadcast %cst_29 : f32 to vector<8x128xf32>
    %200 = arith.addf %199, %198 : vector<8x128xf32>
    %201 = arith.divf %199, %200 : vector<8x128xf32>
    %202 = vector.extract_strided_slice %201 {offsets = [0, 0], sizes = [8, 32], strides = [1, 1]} : vector<8x128xf32> to vector<8x32xf32>
    %203 = vector.extract_strided_slice %201 {offsets = [0, 32], sizes = [8, 32], strides = [1, 1]} : vector<8x128xf32> to vector<8x32xf32>
    %204 = vector.extract_strided_slice %201 {offsets = [0, 96], sizes = [8, 32], strides = [1, 1]} : vector<8x128xf32> to vector<8x32xf32>
    %205 = vector.extract_strided_slice %196 {offsets = [0, 64], sizes = [8, 32], strides = [1, 1]} : vector<8x128xf32> to vector<8x32xf32>
    %206 = math.tanh %205 : vector<8x32xf32>
    %207 = arith.mulf %203, %186 : vector<8x32xf32>
    %208 = arith.mulf %202, %206 : vector<8x32xf32>
    %209 = arith.addf %207, %208 : vector<8x32xf32>
    %210 = math.tanh %209 : vector<8x32xf32>
    %211 = arith.mulf %204, %210 : vector<8x32xf32>
    %212 = vector.extract_strided_slice %27 {offsets = [7, 0, 0], sizes = [1, 8, 32], strides = [1, 1, 1]} : vector<8x8x32xf32> to vector<1x8x32xf32>
    %213 = vector.shape_cast %212 : vector<1x8x32xf32> to vector<8x32xf32>
    %214 = arith.mulf %213, %211 : vector<8x32xf32>
    %215 = arith.addf %192, %214 : vector<8x32xf32>
    %c0_30 = arith.constant 0 : index
    %c0_31 = arith.constant 0 : index
    %216 = vector.load %arg4[%c0_30, %c0_31] : memref<33x8xf32, #tpu.memory_space<vmem>>, vector<32x8xf32>
    %c32 = arith.constant 32 : index
    %c0_32 = arith.constant 0 : index
    %217 = vector.load %arg4[%c32, %c0_32] : memref<33x8xf32, #tpu.memory_space<vmem>>, vector<1x8xf32>
    %cst_33 = arith.constant dense<0.000000e+00> : vector<8x8xf32>
    %218 = tpu.matmul %215, %216, %cst_33 {dimension_numbers = #tpu.dot_dimension_numbers<[1], [0], [0], [1], [0, 0, 1, 1], [], []>} : vector<8x32xf32>, vector<32x8xf32>, vector<8x8xf32> -> vector<8x8xf32>
    %219 = vector.broadcast %217 : vector<1x8xf32> to vector<8x8xf32>
    %220 = arith.addf %218, %219 : vector<8x8xf32>
    %221 = vector.extract_strided_slice %220 {offsets = [0, 0], sizes = [2, 4], strides = [1, 1]} : vector<8x8xf32> to vector<2x4xf32>
    %222 = vector.shape_cast %221 : vector<2x4xf32> to vector<2x1x4xf32>
    %c0_34 = arith.constant 0 : index
    %c0_35 = arith.constant 0 : index
    %c0_36 = arith.constant 0 : index
    %223 = vector.load %arg5[%c0_34, %c0_35, %c0_36] : memref<2x1x4xf32, #tpu.memory_space<vmem>>, vector<2x1x4xf32>
    tpu.vector_store %arg5[%c0_34, %c0_35, %c0_36], %222 {strides = array<i32>} : memref<2x1x4xf32, #tpu.memory_space<vmem>>, vector<2x1x4xf32>,
    %224 = vector.extract_strided_slice %220 {offsets = [2, 4], sizes = [2, 4], strides = [1, 1]} : vector<8x8xf32> to vector<2x4xf32>
    %225 = vector.shape_cast %224 : vector<2x4xf32> to vector<2x1x4xf32>
    %c0_37 = arith.constant 0 : index
    %c0_38 = arith.constant 0 : index
    %c0_39 = arith.constant 0 : index
    %226 = vector.load %arg6[%c0_37, %c0_38, %c0_39] : memref<2x1x4xf32, #tpu.memory_space<vmem>>, vector<2x1x4xf32>
    tpu.vector_store %arg6[%c0_37, %c0_38, %c0_39], %225 {strides = array<i32>} : memref<2x1x4xf32, #tpu.memory_space<vmem>>, vector<2x1x4xf32>,
    return
  }
}

</mosaic_0001>

<llo_original>
// kernel: _forward_impl.1
$region0: #{_forward_impl.1}
  #allocation0 [shape = 'u32[]', space=smem, size = 0x4, offset = 0x4, fixed_abs, tag = 'smem constant byte address 0x4 - core index']
  #allocation1 [shape = 'u32[144,128]{1,0:T(1,128)}', space=vmem, size = 0x12000, scoped, tag = 'internal scratch']
  %s0 = inlined_call_operand.vmem [shape: f32[8,8,32], index: 0, kind: input, shape index: {}]
  %s1 = inlined_call_operand.vmem [shape: f32[32,130], index: 1, kind: input, shape index: {}]
  %s2 = inlined_call_operand.vmem [shape: f32[1,130], index: 2, kind: input, shape index: {}]
  %s3 = inlined_call_operand.vmem [shape: f32[32,128], index: 3, kind: input, shape index: {}]
  %s4 = inlined_call_operand.vmem [shape: f32[33,8], index: 4, kind: input, shape index: {}]
  %s5 = inlined_call_operand.hbm [shape: f32[2,1,4], index: 5, kind: output, shape index: {0}]
  %s6 = inlined_call_operand.hbm [shape: f32[2,1,4], index: 6, kind: output, shape index: {1}]
  %7 = xla_tuple %s5, %s6
  %s8 = sld [smem:[#allocation0]]
  $region38: #{_forward_impl.1} parent=0
    _
  %s10 = ssub.s32 1, %s8
  %s11 = scalar_select 0, %s10, %s8
  $region1: #{_forward_impl.1} parent=0
    #allocation2 [shape = 'u8[1024]{0}', space=vmem, size = 0x400, scoped, tag = 'output window, operand 0, single buffered']
    #allocation3 [shape = 's32[1]{0}', space=sflag, size = 0x4, scoped, tag = 'scoped memory for _forward_impl.1']
    #allocation4 [shape = 'u8[1024]{0}', space=vmem, size = 0x400, scoped, tag = 'output window, operand 1, single buffered']
    #allocation5 [shape = 's32[1]{0}', space=sflag, size = 0x4, scoped, tag = 'scoped memory for _forward_impl.1']
    %12 = vsyncpa [#allocation3], 0
    %13 = vsyncpa [#allocation5], 0
    // Predicated region
    $region2: #{_forward_impl.1} parent=1 // pred_check
      _
    $region3: #{_forward_impl.1} parent=1 // pred_check_branch
      %15 = sbr.rel (0) target = $region5
    $region4: #{_forward_impl.1} parent=1 // pred_region
      _
    $region5: #{_forward_impl.1} parent=1 // pred_fallthru
      _
    // Predicated region
    $region6: #{_forward_impl.1} parent=1 // pred_check
      _
    $region7: #{_forward_impl.1} parent=1 // pred_check_branch
      %17 = sbr.rel (0) target = $region9
    $region8: #{_forward_impl.1} parent=1 // pred_region
      _
    $region9: #{_forward_impl.1} parent=1 // pred_fallthru
      _
    // Predicated region
    $region10: #{_forward_impl.1} parent=1 // pred_check
      _
    $region11: #{_forward_impl.1} parent=1 // pred_check_branch
      %19 = sbr.rel (0) target = $region13
    $region12: #{_forward_impl.1} parent=1 // pred_region
      _
    $region13: #{_forward_impl.1} parent=1 // pred_fallthru
      _
    // Predicated region
    $region14: #{_forward_impl.1} parent=1 // pred_check
      _
    $region15: #{_forward_impl.1} parent=1 // pred_check_branch
      %21 = sbr.rel (0) target = $region17
    $region16: #{_forward_impl.1} parent=1 // pred_region
      _
    $region17: #{_forward_impl.1} parent=1 // pred_fallthru
      _
    // Predicated region
    $region18: #{_forward_impl.1} parent=1 // pred_check
      _
    $region19: #{_forward_impl.1} parent=1 // pred_check_branch
      %23 = sbr.rel (0) target = $region21
    $region20: #{_forward_impl.1} parent=1 // pred_region
      _
    $region21: #{_forward_impl.1} parent=1 // pred_fallthru
      _
    %v24 = vld [vmem:[%s0] sm:$0xff]
    %v25 = vld [vmem:[%s0 + $0x8] sm:$0xff]
    %v26 = vld [vmem:[%s0 + $0x10] sm:$0xff]
    %v27 = vld [vmem:[%s0 + $0x18] sm:$0xff]
    %v28 = vld [vmem:[%s0 + $0x20] sm:$0xff]
    %v29 = vld [vmem:[%s0 + $0x28] sm:$0xff]
    %v30 = vld [vmem:[%s0 + $0x30] sm:$0xff]
    %v31 = vld [vmem:[%s0 + $0x38] sm:$0xff]
    %v32 = vld [vmem:[%s1] sm:$0xff]
    %v33 = vld [vmem:[%s1 + $0x8] sm:$0xff]
    %v34 = vld [vmem:[%s1 + $0x10] sm:$0xff]
    %v35 = vld [vmem:[%s1 + $0x18] sm:$0xff]
    %v36 = vld [vmem:[%s1 + $0x20] sm:$0xff]
    %v37 = vld [vmem:[%s1 + $0x28] sm:$0xff]
    %v38 = vld [vmem:[%s1 + $0x30] sm:$0xff]
    %v39 = vld [vmem:[%s1 + $0x38] sm:$0xff]
    %v40 = vld [vmem:[%s2] sm:$0x3]
    %v42 = vlaneseq
    %v43 = vshrl.u32 %v42, 7
    %v44 = vsub.s32 0, %v43
    %v45 = vrot.slane %v40, %v44
    %v46 = vlaneseq
    %v47 = vshrl.u32 %v46, 7
    %v48 = vsub.s32 1, %v47
    %v49 = vrot.slane %v40, %v48
    %vm52 = vcmask 261120
    %v54 = vsel %vm52, %v24, 0
    %v57 = vsel %vm52, %v25, 0
    %v60 = vsel %vm52, %v26, 0
    %v63 = vsel %vm52, %v27, 0
    %v66 = vsel %vm52, %v28, 0
    %v69 = vsel %vm52, %v29, 0
    %v72 = vsel %vm52, %v30, 0
    %v75 = vsel %vm52, %v31, 0
    %77 = vmatprep.subr.mxu0 %v33
    %78 = vmatpush1.msra.mxu0 %v32
    %79 = vmatprep.subr.mxu0 %v35
    %80 = vmatpush1.msra.mxu0 %v34
    %81 = vmatprep.subr.mxu0 %v37
    %82 = vmatpush1.msra.mxu0 %v36
    %83 = vmatprep.subr.mxu0 %v39
    %84 = vmatpush1.msra.mxu0 %v38
    %85 = vmatprep.subr.mxu0 0.0
    %86 = vmatpush1.msra.mxu0 0.0
    %87 = vmatprep.subr.mxu0 0.0
    %88 = vmatpush1.msra.mxu0 0.0
    %89 = vmatprep.subr.mxu0 0.0
    %90 = vmatpush1.msra.mxu0 0.0
    %91 = vmatprep.subr.mxu0 0.0
    %92 = vmatpush1.msra.mxu0 0.0
    %93 = vmatprep.subr.mxu0 0.0
    %94 = vmatpush1.msra.mxu0 0.0
    %95 = vmatprep.subr.mxu0 0.0
    %96 = vmatpush1.msra.mxu0 0.0
    %97 = vmatprep.subr.mxu0 0.0
    %98 = vmatpush1.msra.mxu0 0.0
    %99 = vmatprep.subr.mxu0 0.0
    %100 = vmatpush1.msra.mxu0 0.0
    %101 = vmatprep.subr.mxu0 0.0
    %102 = vmatpush1.msra.mxu0 0.0
    %103 = vmatprep.subr.mxu0 0.0
    %104 = vmatpush1.msra.mxu0 0.0
    %105 = vmatprep.subr.mxu0 0.0
    %106 = vmatpush1.msra.mxu0 0.0
    %107 = vmatprep.subr.mxu0 0.0
    %108 = vmatpush1.msra.mxu0 0.0
    %109 = vmatprep.subr.mxu0 0.0
    %110 = vmatpush1.msra.mxu0 0.0
    %111 = vmatprep.subr.mxu0 0.0
    %112 = vmatpush1.msra.mxu0 0.0
    %113 = vmatprep.subr.mxu0 0.0
    %114 = vmatpush1.msra.mxu0 0.0
    %115 = vmatprep.subr.mxu0 0.0
    %116 = vmatpush1.msra.mxu0 0.0
    %117 = vmatprep.subr.mxu0 0.0
    %118 = vmatpush1.msra.mxu0 0.0
    %119 = vmatprep.subr.mxu0 0.0
    %120 = vmatpush1.msra.mxu0 0.0
    %121 = vmatprep.subr.mxu0 0.0
    %122 = vmatpush1.msra.mxu0 0.0
    %123 = vmatprep.subr.mxu0 0.0
    %124 = vmatpush1.msra.mxu0 0.0
    %125 = vmatprep.subr.mxu0 0.0
    %126 = vmatpush1.msra.mxu0 0.0
    %127 = vmatprep.subr.mxu0 0.0
    %128 = vmatpush1.msra.mxu0 0.0
    %129 = vmatprep.subr.mxu0 0.0
    %130 = vmatpush1.msra.mxu0 0.0
    %131 = vmatprep.subr.mxu0 0.0
    %132 = vmatpush1.msra.mxu0 0.0
    %133 = vmatprep.subr.mxu0 0.0
    %134 = vmatpush1.msra.mxu0 0.0
    %135 = vmatprep.subr.mxu0 0.0
    %136 = vmatpush1.msra.mxu0 0.0
    %137 = vmatprep.subr.mxu0 0.0
    %138 = vmatpush1.msra.mxu0 0.0
    %139 = vmatprep.subr.mxu0 0.0
    %140 = vmatpush1.msra.mxu0 0.0
    %141 = vmatprep.mubr.f32.mxu0 0.0
    %142 = vmatmul.mubr.f32.gmra.mrb[0].mxu0 %v54
    %v143 = vpop.f32.mrb[0].mxu0
    %v144 = vadd.f32 %v45, %v143
    %v145 = vpop.f32.mrb[0].mxu0
    %v146 = vadd.f32 %v49, %v145
    %147 = vmatprep.mubr.f32.mxu0 0.0
    %148 = vmatmul.mubr.f32.gmra.mrb[0].mxu0 %v57
    %v149 = vpop.f32.mrb[0].mxu0
    %v150 = vadd.f32 %v45, %v149
    %v151 = vpop.f32.mrb[0].mxu0
    %v152 = vadd.f32 %v49, %v151
    %153 = vmatprep.mubr.f32.mxu0 0.0
    %154 = vmatmul.mubr.f32.gmra.mrb[0].mxu0 %v60
    %v155 = vpop.f32.mrb[0].mxu0
    %v156 = vadd.f32 %v45, %v155
    %v157 = vpop.f32.mrb[0].mxu0
    %v158 = vadd.f32 %v49, %v157
    %159 = vmatprep.mubr.f32.mxu0 0.0
    %160 = vmatmul.mubr.f32.gmra.mrb[0].mxu0 %v63
    %v161 = vpop.f32.mrb[0].mxu0
    %v162 = vadd.f32 %v45, %v161
    %v163 = vpop.f32.mrb[0].mxu0
    %v164 = vadd.f32 %v49, %v163
    %165 = vmatprep.mubr.f32.mxu0 0.0
    %166 = vmatmul.mubr.f32.gmra.mrb[0].mxu0 %v66
    %v167 = vpop.f32.mrb[0].mxu0
    %v168 = vadd.f32 %v45, %v167
    %v169 = vpop.f32.mrb[0].mxu0
    %v170 = vadd.f32 %v49, %v169
    %171 = vmatprep.mubr.f32.mxu0 0.0
    %172 = vmatmul.mubr.f32.gmra.mrb[0].mxu0 %v69
    %v173 = vpop.f32.mrb[0].mxu0
    %v174 = vadd.f32 %v45, %v173
    %v175 = vpop.f32.mrb[0].mxu0
    %v176 = vadd.f32 %v49, %v175
    %177 = vmatprep.mubr.f32.mxu0 0.0
    %178 = vmatmul.mubr.f32.gmra.mrb[0].mxu0 %v72
    %v179 = vpop.f32.mrb[0].mxu0
    %v180 = vadd.f32 %v45, %v179
    %v181 = vpop.f32.mrb[0].mxu0
    %v182 = vadd.f32 %v49, %v181
    %183 = vmatprep.mubr.f32.mxu0 0.0
    %184 = vmatmul.mubr.f32.gmra.mrb[0].mxu0 %v75
    %v185 = vpop.f32.mrb[0].mxu0
    %v186 = vadd.f32 %v45, %v185
    %v187 = vpop.f32.mrb[0].mxu0
    %v188 = vadd.f32 %v49, %v187
    %189 = vdwg.mxu0
    %v190 = vlaneseq
    %v191 = vshrl.u32 %v190, 7
    %vm192 = vcmp.lt.s32.totalorder %v191, 2
    %201 = vrot.lane.b32.xlu0 %v146, 127
    %v202 = vpop.permute.xlu0 %201
    %203 = vrot.lane.b32.xlu0 %v152, 127
    %v204 = vpop.permute.xlu0 %203
    %205 = vrot.lane.b32.xlu0 %v158, 127
    %v206 = vpop.permute.xlu0 %205
    %207 = vrot.lane.b32.xlu0 %v164, 127
    %v208 = vpop.permute.xlu0 %207
    %209 = vrot.lane.b32.xlu0 %v170, 127
    %v210 = vpop.permute.xlu0 %209
    %211 = vrot.lane.b32.xlu0 %v176, 127
    %v212 = vpop.permute.xlu0 %211
    %213 = vrot.lane.b32.xlu0 %v182, 127
    %v214 = vpop.permute.xlu0 %213
    %215 = vrot.lane.b32.xlu0 %v188, 127
    %v216 = vpop.permute.xlu0 %215
    %v225 = vsel %vm192, %v146, %v202
    %v226 = vsel %vm192, %v152, %v204
    %v227 = vsel %vm192, %v158, %v206
    %v228 = vsel %vm192, %v164, %v208
    %v229 = vsel %vm192, %v170, %v210
    %v230 = vsel %vm192, %v176, %v212
    %v231 = vsel %vm192, %v182, %v214
    %v232 = vsel %vm192, %v188, %v216
    %vm233 = vcmask 7168
    %v234 = vsel %vm233, %v225, -inf
    %v235 = vsel %vm233, %v226, -inf
    %v236 = vsel %vm233, %v227, -inf
    %v237 = vsel %vm233, %v228, -inf
    %v238 = vsel %vm233, %v229, -inf
    %v239 = vmax.f32 %v234, %v238
    %v240 = vsel %vm233, %v230, -inf
    %v241 = vmax.f32 %v235, %v240
    %v242 = vsel %vm233, %v231, -inf
    %v243 = vmax.f32 %v236, %v242
    %v244 = vsel %vm233, %v232, -inf
    %v245 = vmax.f32 %v237, %v244
    %v246 = vmax.f32 %v239, %v241
    %v247 = vmax.f32 %v243, %v245
    %v248 = vmax.f32 %v246, %v247
    %v249 = vsub.f32 %v225, %v248
    %v250 = vsub.f32 %v226, %v248
    %v251 = vsub.f32 %v227, %v248
    %v252 = vsub.f32 %v228, %v248
    %v253 = vsub.f32 %v229, %v248
    %v254 = vsub.f32 %v230, %v248
    %v255 = vsub.f32 %v231, %v248
    %v256 = vsub.f32 %v232, %v248
    %v257 = vmul.f32 %v249, 1.442695
    %v258 = vpow.pop %v257
    %v259 = vmul.f32 %v250, 1.442695
    %v260 = vpow.pop %v259
    %v261 = vmul.f32 %v251, 1.442695
    %v262 = vpow.pop %v261
    %v263 = vmul.f32 %v252, 1.442695
    %v264 = vpow.pop %v263
    %v265 = vmul.f32 %v253, 1.442695
    %v266 = vpow.pop %v265
    %v267 = vmul.f32 %v254, 1.442695
    %v268 = vpow.pop %v267
    %v269 = vmul.f32 %v255, 1.442695
    %v270 = vpow.pop %v269
    %v271 = vmul.f32 %v256, 1.442695
    %v272 = vpow.pop %v271
    %v273 = vsel %vm233, %v258, 0.0
    %v274 = vsel %vm233, %v260, 0.0
    %v275 = vadd.f32 %v273, %v274
    %v276 = vsel %vm233, %v262, 0.0
    %v277 = vadd.f32 %v275, %v276
    %v278 = vsel %vm233, %v264, 0.0
    %v279 = vadd.f32 %v277, %v278
    %v280 = vsel %vm233, %v266, 0.0
    %v281 = vadd.f32 %v279, %v280
    %v282 = vsel %vm233, %v268, 0.0
    %v283 = vadd.f32 %v281, %v282
    %v284 = vsel %vm233, %v270, 0.0
    %v285 = vadd.f32 %v283, %v284
    %v286 = vsel %vm233, %v272, 0.0
    %v287 = vadd.f32 %v285, %v286
    %v288 = vrcp.pop %v287
    %v289 = vmul.f32 %v258, %v288
    %v290 = vmul.f32 %v260, %v288
    %v291 = vmul.f32 %v262, %v288
    %v292 = vmul.f32 %v264, %v288
    %v293 = vmul.f32 %v266, %v288
    %v294 = vmul.f32 %v268, %v288
    %v295 = vmul.f32 %v270, %v288
    %v296 = vmul.f32 %v272, %v288
    %298 = vset.pattern.permute.xlu0 0
    %299 = vperm.xlu0 %298, %v289
    %v300 = vpop.permute.xlu0 %299
    %303 = vset.pattern.permute.xlu0 0
    %304 = vperm.xlu0 %303, %v290
    %v305 = vpop.permute.xlu0 %304
    %308 = vset.pattern.permute.xlu0 0
    %309 = vperm.xlu0 %308, %v291
    %v310 = vpop.permute.xlu0 %309
    %313 = vset.pattern.permute.xlu0 0
    %314 = vperm.xlu0 %313, %v292
    %v315 = vpop.permute.xlu0 %314
    %318 = vset.pattern.permute.xlu0 0
    %319 = vperm.xlu0 %318, %v293
    %v320 = vpop.permute.xlu0 %319
    %323 = vset.pattern.permute.xlu0 0
    %324 = vperm.xlu0 %323, %v294
    %v325 = vpop.permute.xlu0 %324
    %328 = vset.pattern.permute.xlu0 0
    %329 = vperm.xlu0 %328, %v295
    %v330 = vpop.permute.xlu0 %329
    %333 = vset.pattern.permute.xlu0 0
    %334 = vperm.xlu0 %333, %v296
    %v335 = vpop.permute.xlu0 %334
    %v337 = vld [vmem:[%s3] sm:$0xff]
    %v338 = vld [vmem:[%s3 + $0x8] sm:$0xff]
    %v339 = vld [vmem:[%s3 + $0x10] sm:$0xff]
    %v340 = vld [vmem:[%s3 + $0x18] sm:$0xff]
    %v342 = vsel %vm52, 0.0, 0
    %344 = vmatprep.subr.mxu0 0.0
    %345 = vmatpush1.msra.mxu0 %v337
    %346 = vmatprep.subr.mxu0 0.0
    %347 = vmatpush1.msra.mxu0 %v338
    %348 = vmatprep.subr.mxu0 0.0
    %349 = vmatpush1.msra.mxu0 %v339
    %350 = vmatprep.subr.mxu0 0.0
    %351 = vmatpush1.msra.mxu0 %v340
    %352 = vmatprep.subr.mxu0 0.0
    %353 = vmatpush1.msra.mxu0 0.0
    %354 = vmatprep.subr.mxu0 0.0
    %355 = vmatpush1.msra.mxu0 0.0
    %356 = vmatprep.subr.mxu0 0.0
    %357 = vmatpush1.msra.mxu0 0.0
    %358 = vmatprep.subr.mxu0 0.0
    %359 = vmatpush1.msra.mxu0 0.0
    %360 = vmatprep.subr.mxu0 0.0
    %361 = vmatpush1.msra.mxu0 0.0
    %362 = vmatprep.subr.mxu0 0.0
    %363 = vmatpush1.msra.mxu0 0.0
    %364 = vmatprep.subr.mxu0 0.0
    %365 = vmatpush1.msra.mxu0 0.0
    %366 = vmatprep.subr.mxu0 0.0
    %367 = vmatpush1.msra.mxu0 0.0
    %368 = vmatprep.subr.mxu0 0.0
    %369 = vmatpush1.msra.mxu0 0.0
    %370 = vmatprep.subr.mxu0 0.0
    %371 = vmatpush1.msra.mxu0 0.0
    %372 = vmatprep.subr.mxu0 0.0
    %373 = vmatpush1.msra.mxu0 0.0
    %374 = vmatprep.subr.mxu0 0.0
    %375 = vmatpush1.msra.mxu0 0.0
    %376 = vmatprep.subr.mxu0 0.0
    %377 = vmatpush1.msra.mxu0 0.0
    %378 = vmatprep.subr.mxu0 0.0
    %379 = vmatpush1.msra.mxu0 0.0
    %380 = vmatprep.subr.mxu0 0.0
    %381 = vmatpush1.msra.mxu0 0.0
    %382 = vmatprep.subr.mxu0 0.0
    %383 = vmatpush1.msra.mxu0 0.0
    %384 = vmatprep.subr.mxu0 0.0
    %385 = vmatpush1.msra.mxu0 0.0
    %386 = vmatprep.subr.mxu0 0.0
    %387 = vmatpush1.msra.mxu0 0.0
    %388 = vmatprep.subr.mxu0 0.0
    %389 = vmatpush1.msra.mxu0 0.0
    %390 = vmatprep.subr.mxu0 0.0
    %391 = vmatpush1.msra.mxu0 0.0
    %392 = vmatprep.subr.mxu0 0.0
    %393 = vmatpush1.msra.mxu0 0.0
    %394 = vmatprep.subr.mxu0 0.0
    %395 = vmatpush1.msra.mxu0 0.0
    %396 = vmatprep.subr.mxu0 0.0
    %397 = vmatpush1.msra.mxu0 0.0
    %398 = vmatprep.subr.mxu0 0.0
    %399 = vmatpush1.msra.mxu0 0.0
    %400 = vmatprep.subr.mxu0 0.0
    %401 = vmatpush1.msra.mxu0 0.0
    %402 = vmatprep.subr.mxu0 0.0
    %403 = vmatpush1.msra.mxu0 0.0
    %404 = vmatprep.subr.mxu0 0.0
    %405 = vmatpush1.msra.mxu0 0.0
    %406 = vmatprep.subr.mxu0 0.0
    %407 = vmatpush1.msra.mxu0 0.0
    %408 = vmatprep.mubr.f32.mxu0 0.0
    %409 = vmatmul.mubr.f32.gmra.mrb[0].mxu0 %v342
    %v410 = vpop.f32.mrb[0].mxu0
    %v411 = vadd.f32 0.0, %v410
    %v412 = vpop.f32.mrb[0].mxu0
    %413 = vdwg.mxu0
    %v414 = vadd.f32 %v144, %v411
    %v415 = vxor.u32 %v414, 2147483648
    %v416 = vmul.f32 %v415, 1.442695
    %v417 = vpow.pop %v416
    %v418 = vadd.f32 %v417, 1.0
    %v419 = vrcp.pop %v418
    %v420 = vmul.f32 1.0, %v419
    %v421 = vtanh.pop %v414
    %v422 = vmul.f32 %v420, 0.0
    %424 = vrot.lane.b32.xlu0 %v421, 64
    %v425 = vpop.permute.xlu0 %424
    %v427 = vmul.f32 %v420, %v425
    %429 = vrot.lane.b32.xlu0 %v427, 32
    %v430 = vpop.permute.xlu0 %429
    %v432 = vadd.f32 %v422, %v430
    %v433 = vtanh.pop %v432
    %435 = vrot.lane.b32.xlu0 %v433, 64
    %v436 = vpop.permute.xlu0 %435
    %v438 = vmul.f32 %v420, %v436
    %v439 = vmul.f32 %v300, %v438
    %v440 = vadd.f32 %v439, 0.0
    %442 = vrot.lane.b32.xlu0 %v438, 32
    %v443 = vpop.permute.xlu0 %442
    %v444 = vsel %vm52, %v443, 0
    %446 = vmatprep.subr.mxu0 0.0
    %447 = vmatpush1.msra.mxu0 %v337
    %448 = vmatprep.subr.mxu0 0.0
    %449 = vmatpush1.msra.mxu0 %v338
    %450 = vmatprep.subr.mxu0 0.0
    %451 = vmatpush1.msra.mxu0 %v339
    %452 = vmatprep.subr.mxu0 0.0
    %453 = vmatpush1.msra.mxu0 %v340
    %454 = vmatprep.subr.mxu0 0.0
    %455 = vmatpush1.msra.mxu0 0.0
    %456 = vmatprep.subr.mxu0 0.0
    %457 = vmatpush1.msra.mxu0 0.0
    %458 = vmatprep.subr.mxu0 0.0
    %459 = vmatpush1.msra.mxu0 0.0
    %460 = vmatprep.subr.mxu0 0.0
    %461 = vmatpush1.msra.mxu0 0.0
    %462 = vmatprep.subr.mxu0 0.0
    %463 = vmatpush1.msra.mxu0 0.0
    %464 = vmatprep.subr.mxu0 0.0
    %465 = vmatpush1.msra.mxu0 0.0
    %466 = vmatprep.subr.mxu0 0.0
    %467 = vmatpush1.msra.mxu0 0.0
    %468 = vmatprep.subr.mxu0 0.0
    %469 = vmatpush1.msra.mxu0 0.0
    %470 = vmatprep.subr.mxu0 0.0
    %471 = vmatpush1.msra.mxu0 0.0
    %472 = vmatprep.subr.mxu0 0.0
    %473 = vmatpush1.msra.mxu0 0.0
    %474 = vmatprep.subr.mxu0 0.0
    %475 = vmatpush1.msra.mxu0 0.0
    %476 = vmatprep.subr.mxu0 0.0
    %477 = vmatpush1.msra.mxu0 0.0
    %478 = vmatprep.subr.mxu0 0.0
    %479 = vmatpush1.msra.mxu0 0.0
    %480 = vmatprep.subr.mxu0 0.0
    %481 = vmatpush1.msra.mxu0 0.0
    %482 = vmatprep.subr.mxu0 0.0
    %483 = vmatpush1.msra.mxu0 0.0
    %484 = vmatprep.subr.mxu0 0.0
    %485 = vmatpush1.msra.mxu0 0.0
    %486 = vmatprep.subr.mxu0 0.0
    %487 = vmatpush1.msra.mxu0 0.0
    %488 = vmatprep.subr.mxu0 0.0
    %489 = vmatpush1.msra.mxu0 0.0
    %490 = vmatprep.subr.mxu0 0.0
    %491 = vmatpush1.msra.mxu0 0.0
    %492 = vmatprep.subr.mxu0 0.0
    %493 = vmatpush1.msra.mxu0 0.0
    %494 = vmatprep.subr.mxu0 0.0
    %495 = vmatpush1.msra.mxu0 0.0
    %496 = vmatprep.subr.mxu0 0.0
    %497 = vmatpush1.msra.mxu0 0.0
    %498 = vmatprep.subr.mxu0 0.0
    %499 = vmatpush1.msra.mxu0 0.0
    %500 = vmatprep.subr.mxu0 0.0
    %501 = vmatpush1.msra.mxu0 0.0
    %502 = vmatprep.subr.mxu0 0.0
    %503 = vmatpush1.msra.mxu0 0.0
    %504 = vmatprep.subr.mxu0 0.0
    %505 = vmatpush1.msra.mxu0 0.0
    %506 = vmatprep.subr.mxu0 0.0
    %507 = vmatpush1.msra.mxu0 0.0
    %508 = vmatprep.subr.mxu0 0.0
    %509 = vmatpush1.msra.mxu0 0.0
    %510 = vmatprep.mubr.f32.mxu0 0.0
    %511 = vmatmul.mubr.f32.gmra.mrb[0].mxu0 %v444
    %v512 = vpop.f32.mrb[0].mxu0
    %v513 = vadd.f32 0.0, %v512
    %v514 = vpop.f32.mrb[0].mxu0
    %515 = vdwg.mxu0
    %v516 = vadd.f32 %v150, %v513
    %v517 = vxor.u32 %v516, 2147483648
    %v518 = vmul.f32 %v517, 1.442695
    %v519 = vpow.pop %v518
    %v520 = vadd.f32 %v519, 1.0
    %v521 = vrcp.pop %v520
    %v522 = vmul.f32 1.0, %v521
    %v523 = vtanh.pop %v516
    %v524 = vmul.f32 %v522, %v432
    %526 = vrot.lane.b32.xlu0 %v523, 64
    %v527 = vpop.permute.xlu0 %526
    %v529 = vmul.f32 %v522, %v527
    %531 = vrot.lane.b32.xlu0 %v529, 32
    %v532 = vpop.permute.xlu0 %531
    %v534 = vadd.f32 %v524, %v532
    %v535 = vtanh.pop %v534
    %537 = vrot.lane.b32.xlu0 %v535, 64
    %v538 = vpop.permute.xlu0 %537
    %v540 = vmul.f32 %v522, %v538
    %v541 = vmul.f32 %v305, %v540
    %v542 = vadd.f32 %v440, %v541
    %544 = vrot.lane.b32.xlu0 %v540, 32
    %v545 = vpop.permute.xlu0 %544
    %v546 = vsel %vm52, %v545, 0
    %548 = vmatprep.subr.mxu0 0.0
    %549 = vmatpush1.msra.mxu0 %v337
    %550 = vmatprep.subr.mxu0 0.0
    %551 = vmatpush1.msra.mxu0 %v338
    %552 = vmatprep.subr.mxu0 0.0
    %553 = vmatpush1.msra.mxu0 %v339
    %554 = vmatprep.subr.mxu0 0.0
    %555 = vmatpush1.msra.mxu0 %v340
    %556 = vmatprep.subr.mxu0 0.0
    %557 = vmatpush1.msra.mxu0 0.0
    %558 = vmatprep.subr.mxu0 0.0
    %559 = vmatpush1.msra.mxu0 0.0
    %560 = vmatprep.subr.mxu0 0.0
    %561 = vmatpush1.msra.mxu0 0.0
    %562 = vmatprep.subr.mxu0 0.0
    %563 = vmatpush1.msra.mxu0 0.0
    %564 = vmatprep.subr.mxu0 0.0
    %565 = vmatpush1.msra.mxu0 0.0
    %566 = vmatprep.subr.mxu0 0.0
    %567 = vmatpush1.msra.mxu0 0.0
    %568 = vmatprep.subr.mxu0 0.0
    %569 = vmatpush1.msra.mxu0 0.0
    %570 = vmatprep.subr.mxu0 0.0
    %571 = vmatpush1.msra.mxu0 0.0
    %572 = vmatprep.subr.mxu0 0.0
    %573 = vmatpush1.msra.mxu0 0.0
    %574 = vmatprep.subr.mxu0 0.0
    %575 = vmatpush1.msra.mxu0 0.0
    %576 = vmatprep.subr.mxu0 0.0
    %577 = vmatpush1.msra.mxu0 0.0
    %578 = vmatprep.subr.mxu0 0.0
    %579 = vmatpush1.msra.mxu0 0.0
    %580 = vmatprep.subr.mxu0 0.0
    %581 = vmatpush1.msra.mxu0 0.0
    %582 = vmatprep.subr.mxu0 0.0
    %583 = vmatpush1.msra.mxu0 0.0
    %584 = vmatprep.subr.mxu0 0.0
    %585 = vmatpush1.msra.mxu0 0.0
    %586 = vmatprep.subr.mxu0 0.0
    %587 = vmatpush1.msra.mxu0 0.0
    %588 = vmatprep.subr.mxu0 0.0
    %589 = vmatpush1.msra.mxu0 0.0
    %590 = vmatprep.subr.mxu0 0.0
    %591 = vmatpush1.msra.mxu0 0.0
    %592 = vmatprep.subr.mxu0 0.0
    %593 = vmatpush1.msra.mxu0 0.0
    %594 = vmatprep.subr.mxu0 0.0
    %595 = vmatpush1.msra.mxu0 0.0
    %596 = vmatprep.subr.mxu0 0.0
    %597 = vmatpush1.msra.mxu0 0.0
    %598 = vmatprep.subr.mxu0 0.0
    %599 = vmatpush1.msra.mxu0 0.0
    %600 = vmatprep.subr.mxu0 0.0
    %601 = vmatpush1.msra.mxu0 0.0
    %602 = vmatprep.subr.mxu0 0.0
    %603 = vmatpush1.msra.mxu0 0.0
    %604 = vmatprep.subr.mxu0 0.0
    %605 = vmatpush1.msra.mxu0 0.0
    %606 = vmatprep.subr.mxu0 0.0
    %607 = vmatpush1.msra.mxu0 0.0
    %608 = vmatprep.subr.mxu0 0.0
    %609 = vmatpush1.msra.mxu0 0.0
    %610 = vmatprep.subr.mxu0 0.0
    %611 = vmatpush1.msra.mxu0 0.0
    %612 = vmatprep.mubr.f32.mxu0 0.0
    %613 = vmatmul.mubr.f32.gmra.mrb[0].mxu0 %v546
    %v614 = vpop.f32.mrb[0].mxu0
    %v615 = vadd.f32 0.0, %v614
    %v616 = vpop.f32.mrb[0].mxu0
    %617 = vdwg.mxu0
    %v618 = vadd.f32 %v156, %v615
    %v619 = vxor.u32 %v618, 2147483648
    %v620 = vmul.f32 %v619, 1.442695
    %v621 = vpow.pop %v620
    %v622 = vadd.f32 %v621, 1.0
    %v623 = vrcp.pop %v622
    %v624 = vmul.f32 1.0, %v623
    %v625 = vtanh.pop %v618
    %v626 = vmul.f32 %v624, %v534
    %628 = vrot.lane.b32.xlu0 %v625, 64
    %v629 = vpop.permute.xlu0 %628
    %v631 = vmul.f32 %v624, %v629
    %633 = vrot.lane.b32.xlu0 %v631, 32
    %v634 = vpop.permute.xlu0 %633
    %v636 = vadd.f32 %v626, %v634
    %v637 = vtanh.pop %v636
    %639 = vrot.lane.b32.xlu0 %v637, 64
    %v640 = vpop.permute.xlu0 %639
    %v642 = vmul.f32 %v624, %v640
    %v643 = vmul.f32 %v310, %v642
    %v644 = vadd.f32 %v542, %v643
    %646 = vrot.lane.b32.xlu0 %v642, 32
    %v647 = vpop.permute.xlu0 %646
    %v648 = vsel %vm52, %v647, 0
    %650 = vmatprep.subr.mxu0 0.0
    %651 = vmatpush1.msra.mxu0 %v337
    %652 = vmatprep.subr.mxu0 0.0
    %653 = vmatpush1.msra.mxu0 %v338
    %654 = vmatprep.subr.mxu0 0.0
    %655 = vmatpush1.msra.mxu0 %v339
    %656 = vmatprep.subr.mxu0 0.0
    %657 = vmatpush1.msra.mxu0 %v340
    %658 = vmatprep.subr.mxu0 0.0
    %659 = vmatpush1.msra.mxu0 0.0
    %660 = vmatprep.subr.mxu0 0.0
    %661 = vmatpush1.msra.mxu0 0.0
    %662 = vmatprep.subr.mxu0 0.0
    %663 = vmatpush1.msra.mxu0 0.0
    %664 = vmatprep.subr.mxu0 0.0
    %665 = vmatpush1.msra.mxu0 0.0
    %666 = vmatprep.subr.mxu0 0.0
    %667 = vmatpush1.msra.mxu0 0.0
    %668 = vmatprep.subr.mxu0 0.0
    %669 = vmatpush1.msra.mxu0 0.0
    %670 = vmatprep.subr.mxu0 0.0
    %671 = vmatpush1.msra.mxu0 0.0
    %672 = vmatprep.subr.mxu0 0.0
    %673 = vmatpush1.msra.mxu0 0.0
    %674 = vmatprep.subr.mxu0 0.0
    %675 = vmatpush1.msra.mxu0 0.0
    %676 = vmatprep.subr.mxu0 0.0
    %677 = vmatpush1.msra.mxu0 0.0
    %678 = vmatprep.subr.mxu0 0.0
    %679 = vmatpush1.msra.mxu0 0.0
    %680 = vmatprep.subr.mxu0 0.0
    %681 = vmatpush1.msra.mxu0 0.0
    %682 = vmatprep.subr.mxu0 0.0
    %683 = vmatpush1.msra.mxu0 0.0
    %684 = vmatprep.subr.mxu0 0.0
    %685 = vmatpush1.msra.mxu0 0.0
    %686 = vmatprep.subr.mxu0 0.0
    %687 = vmatpush1.msra.mxu0 0.0
    %688 = vmatprep.subr.mxu0 0.0
    %689 = vmatpush1.msra.mxu0 0.0
    %690 = vmatprep.subr.mxu0 0.0
    %691 = vmatpush1.msra.mxu0 0.0
    %692 = vmatprep.subr.mxu0 0.0
    %693 = vmatpush1.msra.mxu0 0.0
    %694 = vmatprep.subr.mxu0 0.0
    %695 = vmatpush1.msra.mxu0 0.0
    %696 = vmatprep.subr.mxu0 0.0
    %697 = vmatpush1.msra.mxu0 0.0
    %698 = vmatprep.subr.mxu0 0.0
    %699 = vmatpush1.msra.mxu0 0.0
    %700 = vmatprep.subr.mxu0 0.0
    %701 = vmatpush1.msra.mxu0 0.0
    %702 = vmatprep.subr.mxu0 0.0
    %703 = vmatpush1.msra.mxu0 0.0
    %704 = vmatprep.subr.mxu0 0.0
    %705 = vmatpush1.msra.mxu0 0.0
    %706 = vmatprep.subr.mxu0 0.0
    %707 = vmatpush1.msra.mxu0 0.0
    %708 = vmatprep.subr.mxu0 0.0
    %709 = vmatpush1.msra.mxu0 0.0
    %710 = vmatprep.subr.mxu0 0.0
    %711 = vmatpush1.msra.mxu0 0.0
    %712 = vmatprep.subr.mxu0 0.0
    %713 = vmatpush1.msra.mxu0 0.0
    %714 = vmatprep.mubr.f32.mxu0 0.0
    %715 = vmatmul.mubr.f32.gmra.mrb[0].mxu0 %v648
    %v716 = vpop.f32.mrb[0].mxu0
    %v717 = vadd.f32 0.0, %v716
    %v718 = vpop.f32.mrb[0].mxu0
    %719 = vdwg.mxu0
    %v720 = vadd.f32 %v162, %v717
    %v721 = vxor.u32 %v720, 2147483648
    %v722 = vmul.f32 %v721, 1.442695
    %v723 = vpow.pop %v722
    %v724 = vadd.f32 %v723, 1.0
    %v725 = vrcp.pop %v724
    %v726 = vmul.f32 1.0, %v725
    %v727 = vtanh.pop %v720
    %v728 = vmul.f32 %v726, %v636
    %730 = vrot.lane.b32.xlu0 %v727, 64
    %v731 = vpop.permute.xlu0 %730
    %v733 = vmul.f32 %v726, %v731
    %735 = vrot.lane.b32.xlu0 %v733, 32
    %v736 = vpop.permute.xlu0 %735
    %v738 = vadd.f32 %v728, %v736
    %v739 = vtanh.pop %v738
    %741 = vrot.lane.b32.xlu0 %v739, 64
    %v742 = vpop.permute.xlu0 %741
    %v744 = vmul.f32 %v726, %v742
    %v745 = vmul.f32 %v315, %v744
    %v746 = vadd.f32 %v644, %v745
    %748 = vrot.lane.b32.xlu0 %v744, 32
    %v749 = vpop.permute.xlu0 %748
    %v750 = vsel %vm52, %v749, 0
    %752 = vmatprep.subr.mxu0 0.0
    %753 = vmatpush1.msra.mxu0 %v337
    %754 = vmatprep.subr.mxu0 0.0
    %755 = vmatpush1.msra.mxu0 %v338
    %756 = vmatprep.subr.mxu0 0.0
    %757 = vmatpush1.msra.mxu0 %v339
    %758 = vmatprep.subr.mxu0 0.0
    %759 = vmatpush1.msra.mxu0 %v340
    %760 = vmatprep.subr.mxu0 0.0
    %761 = vmatpush1.msra.mxu0 0.0
    %762 = vmatprep.subr.mxu0 0.0
    %763 = vmatpush1.msra.mxu0 0.0
    %764 = vmatprep.subr.mxu0 0.0
    %765 = vmatpush1.msra.mxu0 0.0
    %766 = vmatprep.subr.mxu0 0.0
    %767 = vmatpush1.msra.mxu0 0.0
    %768 = vmatprep.subr.mxu0 0.0
    %769 = vmatpush1.msra.mxu0 0.0
    %770 = vmatprep.subr.mxu0 0.0
    %771 = vmatpush1.msra.mxu0 0.0
    %772 = vmatprep.subr.mxu0 0.0
    %773 = vmatpush1.msra.mxu0 0.0
    %774 = vmatprep.subr.mxu0 0.0
    %775 = vmatpush1.msra.mxu0 0.0
    %776 = vmatprep.subr.mxu0 0.0
    %777 = vmatpush1.msra.mxu0 0.0
    %778 = vmatprep.subr.mxu0 0.0
    %779 = vmatpush1.msra.mxu0 0.0
    %780 = vmatprep.subr.mxu0 0.0
    %781 = vmatpush1.msra.mxu0 0.0
    %782 = vmatprep.subr.mxu0 0.0
    %783 = vmatpush1.msra.mxu0 0.0
    %784 = vmatprep.subr.mxu0 0.0
    %785 = vmatpush1.msra.mxu0 0.0
    %786 = vmatprep.subr.mxu0 0.0
    %787 = vmatpush1.msra.mxu0 0.0
    %788 = vmatprep.subr.mxu0 0.0
    %789 = vmatpush1.msra.mxu0 0.0
    %790 = vmatprep.subr.mxu0 0.0
    %791 = vmatpush1.msra.mxu0 0.0
    %792 = vmatprep.subr.mxu0 0.0
    %793 = vmatpush1.msra.mxu0 0.0
    %794 = vmatprep.subr.mxu0 0.0
    %795 = vmatpush1.msra.mxu0 0.0
    %796 = vmatprep.subr.mxu0 0.0
    %797 = vmatpush1.msra.mxu0 0.0
    %798 = vmatprep.subr.mxu0 0.0
    %799 = vmatpush1.msra.mxu0 0.0
    %800 = vmatprep.subr.mxu0 0.0
    %801 = vmatpush1.msra.mxu0 0.0
    %802 = vmatprep.subr.mxu0 0.0
    %803 = vmatpush1.msra.mxu0 0.0
    %804 = vmatprep.subr.mxu0 0.0
    %805 = vmatpush1.msra.mxu0 0.0
    %806 = vmatprep.subr.mxu0 0.0
    %807 = vmatpush1.msra.mxu0 0.0
    %808 = vmatprep.subr.mxu0 0.0
    %809 = vmatpush1.msra.mxu0 0.0
    %810 = vmatprep.subr.mxu0 0.0
    %811 = vmatpush1.msra.mxu0 0.0
    %812 = vmatprep.subr.mxu0 0.0
    %813 = vmatpush1.msra.mxu0 0.0
    %814 = vmatprep.subr.mxu0 0.0
    %815 = vmatpush1.msra.mxu0 0.0
    %816 = vmatprep.mubr.f32.mxu0 0.0
    %817 = vmatmul.mubr.f32.gmra.mrb[0].mxu0 %v750
    %v818 = vpop.f32.mrb[0].mxu0
    %v819 = vadd.f32 0.0, %v818
    %v820 = vpop.f32.mrb[0].mxu0
    %821 = vdwg.mxu0
    %v822 = vadd.f32 %v168, %v819
    %v823 = vxor.u32 %v822, 2147483648
    %v824 = vmul.f32 %v823, 1.442695
    %v825 = vpow.pop %v824
    %v826 = vadd.f32 %v825, 1.0
    %v827 = vrcp.pop %v826
    %v828 = vmul.f32 1.0, %v827
    %v829 = vtanh.pop %v822
    %v830 = vmul.f32 %v828, %v738
    %832 = vrot.lane.b32.xlu0 %v829, 64
    %v833 = vpop.permute.xlu0 %832
    %v835 = vmul.f32 %v828, %v833
    %837 = vrot.lane.b32.xlu0 %v835, 32
    %v838 = vpop.permute.xlu0 %837
    %v840 = vadd.f32 %v830, %v838
    %v841 = vtanh.pop %v840
    %843 = vrot.lane.b32.xlu0 %v841, 64
    %v844 = vpop.permute.xlu0 %843
    %v846 = vmul.f32 %v828, %v844
    %v847 = vmul.f32 %v320, %v846
    %v848 = vadd.f32 %v746, %v847
    %850 = vrot.lane.b32.xlu0 %v846, 32
    %v851 = vpop.permute.xlu0 %850
    %v852 = vsel %vm52, %v851, 0
    %854 = vmatprep.subr.mxu0 0.0
    %855 = vmatpush1.msra.mxu0 %v337
    %856 = vmatprep.subr.mxu0 0.0
    %857 = vmatpush1.msra.mxu0 %v338
    %858 = vmatprep.subr.mxu0 0.0
    %859 = vmatpush1.msra.mxu0 %v339
    %860 = vmatprep.subr.mxu0 0.0
    %861 = vmatpush1.msra.mxu0 %v340
    %862 = vmatprep.subr.mxu0 0.0
    %863 = vmatpush1.msra.mxu0 0.0
    %864 = vmatprep.subr.mxu0 0.0
    %865 = vmatpush1.msra.mxu0 0.0
    %866 = vmatprep.subr.mxu0 0.0
    %867 = vmatpush1.msra.mxu0 0.0
    %868 = vmatprep.subr.mxu0 0.0
    %869 = vmatpush1.msra.mxu0 0.0
    %870 = vmatprep.subr.mxu0 0.0
    %871 = vmatpush1.msra.mxu0 0.0
    %872 = vmatprep.subr.mxu0 0.0
    %873 = vmatpush1.msra.mxu0 0.0
    %874 = vmatprep.subr.mxu0 0.0
    %875 = vmatpush1.msra.mxu0 0.0
    %876 = vmatprep.subr.mxu0 0.0
    %877 = vmatpush1.msra.mxu0 0.0
    %878 = vmatprep.subr.mxu0 0.0
    %879 = vmatpush1.msra.mxu0 0.0
    %880 = vmatprep.subr.mxu0 0.0
    %881 = vmatpush1.msra.mxu0 0.0
    %882 = vmatprep.subr.mxu0 0.0
    %883 = vmatpush1.msra.mxu0 0.0
    %884 = vmatprep.subr.mxu0 0.0
    %885 = vmatpush1.msra.mxu0 0.0
    %886 = vmatprep.subr.mxu0 0.0
    %887 = vmatpush1.msra.mxu0 0.0
    %888 = vmatprep.subr.mxu0 0.0
    %889 = vmatpush1.msra.mxu0 0.0
    %890 = vmatprep.subr.mxu0 0.0
    %891 = vmatpush1.msra.mxu0 0.0
    %892 = vmatprep.subr.mxu0 0.0
    %893 = vmatpush1.msra.mxu0 0.0
    %894 = vmatprep.subr.mxu0 0.0
    %895 = vmatpush1.msra.mxu0 0.0
    %896 = vmatprep.subr.mxu0 0.0
    %897 = vmatpush1.msra.mxu0 0.0
    %898 = vmatprep.subr.mxu0 0.0
    %899 = vmatpush1.msra.mxu0 0.0
    %900 = vmatprep.subr.mxu0 0.0
    %901 = vmatpush1.msra.mxu0 0.0
    %902 = vmatprep.subr.mxu0 0.0
    %903 = vmatpush1.msra.mxu0 0.0
    %904 = vmatprep.subr.mxu0 0.0
    %905 = vmatpush1.msra.mxu0 0.0
    %906 = vmatprep.subr.mxu0 0.0
    %907 = vmatpush1.msra.mxu0 0.0
    %908 = vmatprep.subr.mxu0 0.0
    %909 = vmatpush1.msra.mxu0 0.0
    %910 = vmatprep.subr.mxu0 0.0
    %911 = vmatpush1.msra.mxu0 0.0
    %912 = vmatprep.subr.mxu0 0.0
    %913 = vmatpush1.msra.mxu0 0.0
    %914 = vmatprep.subr.mxu0 0.0
    %915 = vmatpush1.msra.mxu0 0.0
    %916 = vmatprep.subr.mxu0 0.0
    %917 = vmatpush1.msra.mxu0 0.0
    %918 = vmatprep.mubr.f32.mxu0 0.0
    %919 = vmatmul.mubr.f32.gmra.mrb[0].mxu0 %v852
    %v920 = vpop.f32.mrb[0].mxu0
    %v921 = vadd.f32 0.0, %v920
    %v922 = vpop.f32.mrb[0].mxu0
    %923 = vdwg.mxu0
    %v924 = vadd.f32 %v174, %v921
    %v925 = vxor.u32 %v924, 2147483648
    %v926 = vmul.f32 %v925, 1.442695
    %v927 = vpow.pop %v926
    %v928 = vadd.f32 %v927, 1.0
    %v929 = vrcp.pop %v928
    %v930 = vmul.f32 1.0, %v929
    %v931 = vtanh.pop %v924
    %v932 = vmul.f32 %v930, %v840
    %934 = vrot.lane.b32.xlu0 %v931, 64
    %v935 = vpop.permute.xlu0 %934
    %v937 = vmul.f32 %v930, %v935
    %939 = vrot.lane.b32.xlu0 %v937, 32
    %v940 = vpop.permute.xlu0 %939
    %v942 = vadd.f32 %v932, %v940
    %v943 = vtanh.pop %v942
    %945 = vrot.lane.b32.xlu0 %v943, 64
    %v946 = vpop.permute.xlu0 %945
    %v948 = vmul.f32 %v930, %v946
    %v949 = vmul.f32 %v325, %v948
    %v950 = vadd.f32 %v848, %v949
    %952 = vrot.lane.b32.xlu0 %v948, 32
    %v953 = vpop.permute.xlu0 %952
    %v954 = vsel %vm52, %v953, 0
    %956 = vmatprep.subr.mxu0 0.0
    %957 = vmatpush1.msra.mxu0 %v337
    %958 = vmatprep.subr.mxu0 0.0
    %959 = vmatpush1.msra.mxu0 %v338
    %960 = vmatprep.subr.mxu0 0.0
    %961 = vmatpush1.msra.mxu0 %v339
    %962 = vmatprep.subr.mxu0 0.0
    %963 = vmatpush1.msra.mxu0 %v340
    %964 = vmatprep.subr.mxu0 0.0
    %965 = vmatpush1.msra.mxu0 0.0
    %966 = vmatprep.subr.mxu0 0.0
    %967 = vmatpush1.msra.mxu0 0.0
    %968 = vmatprep.subr.mxu0 0.0
    %969 = vmatpush1.msra.mxu0 0.0
    %970 = vmatprep.subr.mxu0 0.0
    %971 = vmatpush1.msra.mxu0 0.0
    %972 = vmatprep.subr.mxu0 0.0
    %973 = vmatpush1.msra.mxu0 0.0
    %974 = vmatprep.subr.mxu0 0.0
    %975 = vmatpush1.msra.mxu0 0.0
    %976 = vmatprep.subr.mxu0 0.0
    %977 = vmatpush1.msra.mxu0 0.0
    %978 = vmatprep.subr.mxu0 0.0
    %979 = vmatpush1.msra.mxu0 0.0
    %980 = vmatprep.subr.mxu0 0.0
    %981 = vmatpush1.msra.mxu0 0.0
    %982 = vmatprep.subr.mxu0 0.0
    %983 = vmatpush1.msra.mxu0 0.0
    %984 = vmatprep.subr.mxu0 0.0
    %985 = vmatpush1.msra.mxu0 0.0
    %986 = vmatprep.subr.mxu0 0.0
    %987 = vmatpush1.msra.mxu0 0.0
    %988 = vmatprep.subr.mxu0 0.0
    %989 = vmatpush1.msra.mxu0 0.0
    %990 = vmatprep.subr.mxu0 0.0
    %991 = vmatpush1.msra.mxu0 0.0
    %992 = vmatprep.subr.mxu0 0.0
    %993 = vmatpush1.msra.mxu0 0.0
    %994 = vmatprep.subr.mxu0 0.0
    %995 = vmatpush1.msra.mxu0 0.0
    %996 = vmatprep.subr.mxu0 0.0
    %997 = vmatpush1.msra.mxu0 0.0
    %998 = vmatprep.subr.mxu0 0.0
    %999 = vmatpush1.msra.mxu0 0.0
    %1000 = vmatprep.subr.mxu0 0.0
    %1001 = vmatpush1.msra.mxu0 0.0
    %1002 = vmatprep.subr.mxu0 0.0
    %1003 = vmatpush1.msra.mxu0 0.0
    %1004 = vmatprep.subr.mxu0 0.0
    %1005 = vmatpush1.msra.mxu0 0.0
    %1006 = vmatprep.subr.mxu0 0.0
    %1007 = vmatpush1.msra.mxu0 0.0
    %1008 = vmatprep.subr.mxu0 0.0
    %1009 = vmatpush1.msra.mxu0 0.0
    %1010 = vmatprep.subr.mxu0 0.0
    %1011 = vmatpush1.msra.mxu0 0.0
    %1012 = vmatprep.subr.mxu0 0.0
    %1013 = vmatpush1.msra.mxu0 0.0
    %1014 = vmatprep.subr.mxu0 0.0
    %1015 = vmatpush1.msra.mxu0 0.0
    %1016 = vmatprep.subr.mxu0 0.0
    %1017 = vmatpush1.msra.mxu0 0.0
    %1018 = vmatprep.subr.mxu0 0.0
    %1019 = vmatpush1.msra.mxu0 0.0
    %1020 = vmatprep.mubr.f32.mxu0 0.0
    %1021 = vmatmul.mubr.f32.gmra.mrb[0].mxu0 %v954
    %v1022 = vpop.f32.mrb[0].mxu0
    %v1023 = vadd.f32 0.0, %v1022
    %v1024 = vpop.f32.mrb[0].mxu0
    %1025 = vdwg.mxu0
    %v1026 = vadd.f32 %v180, %v1023
    %v1027 = vxor.u32 %v1026, 2147483648
    %v1028 = vmul.f32 %v1027, 1.442695
    %v1029 = vpow.pop %v1028
    %v1030 = vadd.f32 %v1029, 1.0
    %v1031 = vrcp.pop %v1030
    %v1032 = vmul.f32 1.0, %v1031
    %v1033 = vtanh.pop %v1026
    %v1034 = vmul.f32 %v1032, %v942
    %1036 = vrot.lane.b32.xlu0 %v1033, 64
    %v1037 = vpop.permute.xlu0 %1036
    %v1039 = vmul.f32 %v1032, %v1037
    %1041 = vrot.lane.b32.xlu0 %v1039, 32
    %v1042 = vpop.permute.xlu0 %1041
    %v1044 = vadd.f32 %v1034, %v1042
    %v1045 = vtanh.pop %v1044
    %1047 = vrot.lane.b32.xlu0 %v1045, 64
    %v1048 = vpop.permute.xlu0 %1047
    %v1050 = vmul.f32 %v1032, %v1048
    %v1051 = vmul.f32 %v330, %v1050
    %v1052 = vadd.f32 %v950, %v1051
    %1054 = vrot.lane.b32.xlu0 %v1050, 32
    %v1055 = vpop.permute.xlu0 %1054
    %v1056 = vsel %vm52, %v1055, 0
    %1058 = vmatprep.subr.mxu0 0.0
    %1059 = vmatpush1.msra.mxu0 %v337
    %1060 = vmatprep.subr.mxu0 0.0
    %1061 = vmatpush1.msra.mxu0 %v338
    %1062 = vmatprep.subr.mxu0 0.0
    %1063 = vmatpush1.msra.mxu0 %v339
    %1064 = vmatprep.subr.mxu0 0.0
    %1065 = vmatpush1.msra.mxu0 %v340
    %1066 = vmatprep.subr.mxu0 0.0
    %1067 = vmatpush1.msra.mxu0 0.0
    %1068 = vmatprep.subr.mxu0 0.0
    %1069 = vmatpush1.msra.mxu0 0.0
    %1070 = vmatprep.subr.mxu0 0.0
    %1071 = vmatpush1.msra.mxu0 0.0
    %1072 = vmatprep.subr.mxu0 0.0
    %1073 = vmatpush1.msra.mxu0 0.0
    %1074 = vmatprep.subr.mxu0 0.0
    %1075 = vmatpush1.msra.mxu0 0.0
    %1076 = vmatprep.subr.mxu0 0.0
    %1077 = vmatpush1.msra.mxu0 0.0
    %1078 = vmatprep.subr.mxu0 0.0
    %1079 = vmatpush1.msra.mxu0 0.0
    %1080 = vmatprep.subr.mxu0 0.0
    %1081 = vmatpush1.msra.mxu0 0.0
    %1082 = vmatprep.subr.mxu0 0.0
    %1083 = vmatpush1.msra.mxu0 0.0
    %1084 = vmatprep.subr.mxu0 0.0
    %1085 = vmatpush1.msra.mxu0 0.0
    %1086 = vmatprep.subr.mxu0 0.0
    %1087 = vmatpush1.msra.mxu0 0.0
    %1088 = vmatprep.subr.mxu0 0.0
    %1089 = vmatpush1.msra.mxu0 0.0
    %1090 = vmatprep.subr.mxu0 0.0
    %1091 = vmatpush1.msra.mxu0 0.0
    %1092 = vmatprep.subr.mxu0 0.0
    %1093 = vmatpush1.msra.mxu0 0.0
    %1094 = vmatprep.subr.mxu0 0.0
    %1095 = vmatpush1.msra.mxu0 0.0
    %1096 = vmatprep.subr.mxu0 0.0
    %1097 = vmatpush1.msra.mxu0 0.0
    %1098 = vmatprep.subr.mxu0 0.0
    %1099 = vmatpush1.msra.mxu0 0.0
    %1100 = vmatprep.subr.mxu0 0.0
    %1101 = vmatpush1.msra.mxu0 0.0
    %1102 = vmatprep.subr.mxu0 0.0
    %1103 = vmatpush1.msra.mxu0 0.0
    %1104 = vmatprep.subr.mxu0 0.0
    %1105 = vmatpush1.msra.mxu0 0.0
    %1106 = vmatprep.subr.mxu0 0.0
    %1107 = vmatpush1.msra.mxu0 0.0
    %1108 = vmatprep.subr.mxu0 0.0
    %1109 = vmatpush1.msra.mxu0 0.0
    %1110 = vmatprep.subr.mxu0 0.0
    %1111 = vmatpush1.msra.mxu0 0.0
    %1112 = vmatprep.subr.mxu0 0.0
    %1113 = vmatpush1.msra.mxu0 0.0
    %1114 = vmatprep.subr.mxu0 0.0
    %1115 = vmatpush1.msra.mxu0 0.0
    %1116 = vmatprep.subr.mxu0 0.0
    %1117 = vmatpush1.msra.mxu0 0.0
    %1118 = vmatprep.subr.mxu0 0.0
    %1119 = vmatpush1.msra.mxu0 0.0
    %1120 = vmatprep.subr.mxu0 0.0
    %1121 = vmatpush1.msra.mxu0 0.0
    %1122 = vmatprep.mubr.f32.mxu0 0.0
    %1123 = vmatmul.mubr.f32.gmra.mrb[0].mxu0 %v1056
    %v1124 = vpop.f32.mrb[0].mxu0
    %v1125 = vadd.f32 0.0, %v1124
    %v1126 = vpop.f32.mrb[0].mxu0
    %1127 = vdwg.mxu0
    %v1128 = vadd.f32 %v186, %v1125
    %v1129 = vxor.u32 %v1128, 2147483648
    %v1130 = vmul.f32 %v1129, 1.442695
    %v1131 = vpow.pop %v1130
    %v1132 = vadd.f32 %v1131, 1.0
    %v1133 = vrcp.pop %v1132
    %v1134 = vmul.f32 1.0, %v1133
    %v1135 = vtanh.pop %v1128
    %v1136 = vmul.f32 %v1134, %v1044
    %1138 = vrot.lane.b32.xlu0 %v1135, 64
    %v1139 = vpop.permute.xlu0 %1138
    %v1141 = vmul.f32 %v1134, %v1139
    %1143 = vrot.lane.b32.xlu0 %v1141, 32
    %v1144 = vpop.permute.xlu0 %1143
    %v1146 = vadd.f32 %v1136, %v1144
    %v1147 = vtanh.pop %v1146
    %1149 = vrot.lane.b32.xlu0 %v1147, 64
    %v1150 = vpop.permute.xlu0 %1149
    %v1152 = vmul.f32 %v1134, %v1150
    %v1153 = vmul.f32 %v335, %v1152
    %v1154 = vadd.f32 %v1052, %v1153
    %v1155 = vld [vmem:[%s4] sm:$0xff]
    %v1156 = vld [vmem:[%s4 + $0x8] sm:$0xff]
    %v1157 = vld [vmem:[%s4 + $0x10] sm:$0xff]
    %v1158 = vld [vmem:[%s4 + $0x18] sm:$0xff]
    %v1159 = vld [vmem:[%s4 + $0x20] sm:$0x1]
    %v1160 = vlaneseq
    %v1161 = vshrl.u32 %v1160, 7
    %v1162 = vsub.s32 0, %v1161
    %v1163 = vrot.slane %v1159, %v1162
    %1165 = vrot.lane.b32.xlu0 %v1154, 32
    %v1166 = vpop.permute.xlu0 %1165
    %v1167 = vsel %vm52, %v1166, 0
    %1169 = vmatprep.subr.mxu0 0.0
    %1170 = vmatpush1.msra.mxu0 %v1155
    %1171 = vmatprep.subr.mxu0 0.0
    %1172 = vmatpush1.msra.mxu0 %v1156
    %1173 = vmatprep.subr.mxu0 0.0
    %1174 = vmatpush1.msra.mxu0 %v1157
    %1175 = vmatprep.subr.mxu0 0.0
    %1176 = vmatpush1.msra.mxu0 %v1158
    %1177 = vmatprep.subr.mxu0 0.0
    %1178 = vmatpush1.msra.mxu0 0.0
    %1179 = vmatprep.subr.mxu0 0.0
    %1180 = vmatpush1.msra.mxu0 0.0
    %1181 = vmatprep.subr.mxu0 0.0
    %1182 = vmatpush1.msra.mxu0 0.0
    %1183 = vmatprep.subr.mxu0 0.0
    %1184 = vmatpush1.msra.mxu0 0.0
    %1185 = vmatprep.subr.mxu0 0.0
    %1186 = vmatpush1.msra.mxu0 0.0
    %1187 = vmatprep.subr.mxu0 0.0
    %1188 = vmatpush1.msra.mxu0 0.0
    %1189 = vmatprep.subr.mxu0 0.0
    %1190 = vmatpush1.msra.mxu0 0.0
    %1191 = vmatprep.subr.mxu0 0.0
    %1192 = vmatpush1.msra.mxu0 0.0
    %1193 = vmatprep.subr.mxu0 0.0
    %1194 = vmatpush1.msra.mxu0 0.0
    %1195 = vmatprep.subr.mxu0 0.0
    %1196 = vmatpush1.msra.mxu0 0.0
    %1197 = vmatprep.subr.mxu0 0.0
    %1198 = vmatpush1.msra.mxu0 0.0
    %1199 = vmatprep.subr.mxu0 0.0
    %1200 = vmatpush1.msra.mxu0 0.0
    %1201 = vmatprep.subr.mxu0 0.0
    %1202 = vmatpush1.msra.mxu0 0.0
    %1203 = vmatprep.subr.mxu0 0.0
    %1204 = vmatpush1.msra.mxu0 0.0
    %1205 = vmatprep.subr.mxu0 0.0
    %1206 = vmatpush1.msra.mxu0 0.0
    %1207 = vmatprep.subr.mxu0 0.0
    %1208 = vmatpush1.msra.mxu0 0.0
    %1209 = vmatprep.subr.mxu0 0.0
    %1210 = vmatpush1.msra.mxu0 0.0
    %1211 = vmatprep.subr.mxu0 0.0
    %1212 = vmatpush1.msra.mxu0 0.0
    %1213 = vmatprep.subr.mxu0 0.0
    %1214 = vmatpush1.msra.mxu0 0.0
    %1215 = vmatprep.subr.mxu0 0.0
    %1216 = vmatpush1.msra.mxu0 0.0
    %1217 = vmatprep.subr.mxu0 0.0
    %1218 = vmatpush1.msra.mxu0 0.0
    %1219 = vmatprep.subr.mxu0 0.0
    %1220 = vmatpush1.msra.mxu0 0.0
    %1221 = vmatprep.subr.mxu0 0.0
    %1222 = vmatpush1.msra.mxu0 0.0
    %1223 = vmatprep.subr.mxu0 0.0
    %1224 = vmatpush1.msra.mxu0 0.0
    %1225 = vmatprep.subr.mxu0 0.0
    %1226 = vmatpush1.msra.mxu0 0.0
    %1227 = vmatprep.subr.mxu0 0.0
    %1228 = vmatpush1.msra.mxu0 0.0
    %1229 = vmatprep.subr.mxu0 0.0
    %1230 = vmatpush1.msra.mxu0 0.0
    %1231 = vmatprep.subr.mxu0 0.0
    %1232 = vmatpush1.msra.mxu0 0.0
    %1233 = vmatprep.mubr.f32.mxu0 0.0
    %1234 = vmatmul.mubr.f32.gmra.mrb[0].mxu0 %v1167
    %v1235 = vpop.f32.mrb[0].mxu0
    %v1236 = vadd.f32 %v1163, %v1235
    %v1237 = vpop.f32.mrb[0].mxu0
    %1238 = vdwg.mxu0
    %v1241 = vunpack.c.l.s4 1966171168
    %v1242 = vunpack.c.0.s8 %v1241
    %v1243 = vlaneseq
    %v1244 = vshrl.u32 %v1243, 7
    %v1245 = vsub.s32 %v1242, %v1244
    %v1246 = vrot.slane %v1236, %v1245
    %v1247 = vcombine.high %v1246, %v1246
    %v1249 = vunpack.c.l.s4 1966171168
    %v1250 = vunpack.c.0.s8 %v1249
    %v1251 = vlaneseq
    %v1252 = vshrl.u32 %v1251, 7
    %v1253 = vsub.s32 %v1250, %v1252
    %v1254 = vrot.slane %v1246, %v1253
    %v1256 = vunpack.c.l.s4 1966171168
    %v1257 = vunpack.c.0.s8 %v1256
    %v1258 = vlaneseq
    %v1259 = vshrl.u32 %v1258, 7
    %v1260 = vsub.s32 %v1257, %v1259
    %v1261 = vrot.slane %v1247, %v1260
    %vm1264 = vcmask 24576
    %1265 = vst.msk [vmem:[#allocation2] sm:$0x1] %vm1264, %v1254
    %1266 = vst.msk [vmem:[#allocation2 + $0x1] sm:$0x1] %vm1264, %v1261
    %v1267 = vcombine.high %v1254, %v1254
    %v1268 = vcombine.high %v1261, %v1261
    %v1269 = vlaneseq
    %v1270 = vshrl.u32 %v1269, 7
    %v1271 = vsub.s32 0, %v1270
    %v1272 = vrot.slane %v1267, %v1271
    %v1273 = vlaneseq
    %v1274 = vshrl.u32 %v1273, 7
    %v1275 = vsub.s32 0, %v1274
    %v1276 = vrot.slane %v1268, %v1275
    %1277 = vrot.lane.b32.xlu0 %v1272, 124
    %v1278 = vpop.permute.xlu0 %1277
    %1279 = vrot.lane.b32.xlu0 %v1276, 124
    %v1280 = vpop.permute.xlu0 %1279
    %1283 = vst.msk [vmem:[#allocation4] sm:$0x1] %vm1264, %v1278
    %1284 = vst.msk [vmem:[#allocation4 + $0x1] sm:$0x1] %vm1264, %v1280
    // Predicated region
    $region22: #{_forward_impl.1} parent=1 // pred_check
      _
    $region23: #{_forward_impl.1} parent=1 // pred_check_branch
      %1286 = sbr.rel (0) target = $region25
    $region24: #{_forward_impl.1} parent=1 // pred_region
      %s1288 = ssub.s32 32, 32
      %1289 = vsyncadd [#allocation3], %s1288
      %s1290 = sshll.u32 [#allocation2], 4
      %s1291 = int_to_ptr.vmem [resolvable:$true] %s1290
      %1296 = dma.vmem_to_hbm [thread:$0]  %s1291, 32, %s5, [#allocation3], 16, 16, 1
    $region25: #{_forward_impl.1} parent=1 // pred_fallthru
      _
    // Predicated region
    $region26: #{_forward_impl.1} parent=1 // pred_check
      _
    $region27: #{_forward_impl.1} parent=1 // pred_check_branch
      %1298 = sbr.rel (0) target = $region29
    $region28: #{_forward_impl.1} parent=1 // pred_region
      %s1300 = ssub.s32 32, 32
      %1301 = vsyncadd [#allocation5], %s1300
      %s1302 = sshll.u32 [#allocation4], 4
      %s1303 = int_to_ptr.vmem [resolvable:$true] %s1302
      %1308 = dma.vmem_to_hbm [thread:$0]  %s1303, 32, %s6, [#allocation5], 16, 16, 1
    $region29: #{_forward_impl.1} parent=1 // pred_fallthru
      _
    // Predicated region
    $region30: #{_forward_impl.1} parent=1 // pred_check
      _
    $region31: #{_forward_impl.1} parent=1 // pred_check_branch
      %1310 = sbr.rel (0) target = $region33
    $region32: #{_forward_impl.1} parent=1 // pred_region
      %1311 = dma.done [#allocation3], 32
    $region33: #{_forward_impl.1} parent=1 // pred_fallthru
      _
    // Predicated region
    $region34: #{_forward_impl.1} parent=1 // pred_check
      _
    $region35: #{_forward_impl.1} parent=1 // pred_check_branch
      %1313 = sbr.rel (0) target = $region37
    $region36: #{_forward_impl.1} parent=1 // pred_region
      %1314 = dma.done [#allocation5], 32
    $region37: #{_forward_impl.1} parent=1 // pred_fallthru
      _
    %1315 = vsyncpa [#allocation3], 1
    %1316 = vsyncpa [#allocation5], 1

</llo_original>
